<compile_context>
chip_gen: v6e
topology: v6e:2x2x1
jax: 0.10.0
libtpu: 0.0.40
codegen_flags: <defaults>
</compile_context>

<pallas_src>
import functools
import math

import jax
import jax.numpy as jnp
import numpy as np
from jax.experimental import pallas as pl
from jax.experimental.pallas import tpu as pltpu


def _mha_kernel(q_ref, k_ref, v_ref, bias_ref,
                wq_ref, bq_ref, wk_ref, bk_ref, wv_ref, bv_ref,
                wo_ref, bo_ref,
                o_ref,
                acc_ref,
                *, num_heads, depth):
    scale = jnp.float32(1.0 / math.sqrt(depth))

    xq = q_ref[...]          # (S, D) bf16
    xk = k_ref[...]          # (S, D) bf16
    xv = v_ref[...]          # (S, D) bf16
    bias = bias_ref[...]     # (S, S) f32, already == mask * -1e9

    acc_ref[...] = jnp.zeros_like(acc_ref)

    for h in range(num_heads):           # static, fully unrolled (H is small)
        # Per-head projections; head index is a leading axis -> no lane slicing.
        q_h = (jnp.dot(xq, wq_ref[h], preferred_element_type=jnp.float32)
               + bq_ref[h]) * scale      # fold 1/sqrt(depth) into Q once
        k_h = (jnp.dot(xk, wk_ref[h], preferred_element_type=jnp.float32)
               + bk_ref[h])
        v_h = (jnp.dot(xv, wv_ref[h], preferred_element_type=jnp.float32)
               + bv_ref[h])

        # logits = (q/sqrt(d)) @ k^T + mask*(-1e9)   (f32 accumulation)
        logits = jax.lax.dot_general(
            q_h.astype(jnp.bfloat16), k_h.astype(jnp.bfloat16),
            (((1,), (1,)), ((), ())),
            preferred_element_type=jnp.float32)
        logits = logits + bias

        # Numerically-stable softmax, normalization deferred past the PV matmul.
        m = jnp.max(logits, axis=-1, keepdims=True)
        e = jnp.exp(logits - m)                          # f32
        denom = jnp.sum(e, axis=-1, keepdims=True)       # f32, >= 1

        ctx = jnp.dot(e.astype(jnp.bfloat16), v_h.astype(jnp.bfloat16),
                      preferred_element_type=jnp.float32)
        ctx = ctx * pl.reciprocal(denom, approx=True)

        # concat_h(ctx_h) @ Wo == sum_h ctx_h @ Wo[h]  (decomposed out-proj)
        acc_ref[...] += jnp.dot(ctx.astype(jnp.bfloat16), wo_ref[h],
                                preferred_element_type=jnp.float32)

    o_ref[...] = (acc_ref[...] + bo_ref[...]).astype(o_ref.dtype)


def multihead_attention(query, key, value, mask, params, *, num_heads):
    """Pallas implementation of MultiheadAttention.forward.

    query/key/value: [B, S, D] float32.
    mask: None, [S, S], [1, S, S] (shared across batch) or [B, S, S];
          1.0 = masked (reference convention: logits += mask * -1e9).
    params: (wq, bq, wk, bk, wv, bv, wo, bo); weights [D, D] used as x @ W + b,
            biases [1, D].
    """
    B, S, D = query.shape
    assert D % num_heads == 0
    depth = D // num_heads
    wq, bq, wk, bk, wv, bv, wo, bo = params

    f32, bf16 = jnp.float32, jnp.bfloat16

    # bf16 MXU operands (halves DMA bytes and feeds the bf16 MXU directly);
    # biases and softmax math stay f32.
    q_bf = jnp.asarray(query, bf16)
    k_bf = jnp.asarray(key, bf16)
    v_bf = jnp.asarray(value, bf16)

    def per_head_w(w):      # (D, D) -> (H, D, depth): x @ W[:, h*dh:(h+1)*dh]
        return jnp.transpose(jnp.asarray(w, bf16).reshape(D, num_heads, depth),
                             (1, 0, 2))

    def per_head_b(b):      # (1, D) -> (H, 1, depth), kept f32
        return jnp.transpose(jnp.asarray(b, f32).reshape(1, num_heads, depth),
                             (1, 0, 2))

    wq_h, wk_h, wv_h = per_head_w(wq), per_head_w(wk), per_head_w(wv)
    bq_h, bk_h, bv_h = per_head_b(bq), per_head_b(bk), per_head_b(bv)
    wo_h = jnp.asarray(wo, bf16).reshape(num_heads, depth, D)
    bo2 = jnp.asarray(bo, f32).reshape(1, D)

    # Additive attention bias, pre-scaled by -1e9 once outside the kernel.
    if mask is None:
        bias = jnp.zeros((S, S), f32)
        shared_bias = True
    else:
        m = jnp.asarray(mask, f32)
        if m.ndim == 2:
            bias, shared_bias = m * f32(-1e9), True
        elif m.ndim == 3 and m.shape[0] == 1:
            bias, shared_bias = m[0] * f32(-1e9), True
        else:
            bias = jnp.broadcast_to(m, (B, S, S)) * f32(-1e9)
            shared_bias = False

    row_spec = pl.BlockSpec((pl.Squeezed(), S, D), lambda b: (b, 0, 0))
    if shared_bias:
        bias_spec = pl.BlockSpec((S, S), lambda b: (0, 0))           # resident
    else:
        bias_spec = pl.BlockSpec((pl.Squeezed(), S, S), lambda b: (b, 0, 0))
    win_spec = pl.BlockSpec((num_heads, D, depth), lambda b: (0, 0, 0))
    bin_spec = pl.BlockSpec((num_heads, 1, depth), lambda b: (0, 0, 0))
    wo_spec = pl.BlockSpec((num_heads, depth, D), lambda b: (0, 0, 0))
    bo_spec = pl.BlockSpec((1, D), lambda b: (0, 0))

    kernel = functools.partial(_mha_kernel, num_heads=num_heads, depth=depth)

    return pl.pallas_call(
        kernel,
        out_shape=jax.ShapeDtypeStruct((B, S, D), query.dtype),
        grid=(B,),
        in_specs=[row_spec, row_spec, row_spec, bias_spec,
                  win_spec, bin_spec, win_spec, bin_spec, win_spec, bin_spec,
                  wo_spec, bo_spec],
        out_specs=row_spec,
        scratch_shapes=[pltpu.VMEM((S, D), jnp.float32)],   # output accumulator
        compiler_params=pltpu.CompilerParams(
            dimension_semantics=("parallel",),
            vmem_limit_bytes=32 * 1024 * 1024),
    )(q_bf, k_bf, v_bf, bias,
      wq_h, bq_h, wk_h, bk_h, wv_h, bv_h, wo_h, bo2)


if __name__ == "__main__":
    B, S, d_model, num_heads = 2, 8, 32, 4

    key0 = jax.random.PRNGKey(0)
    ks = jax.random.split(key0, 12)
    wscale = 0.1

    def _w(k):
        return wscale * jax.random.normal(k, (d_model, d_model), jnp.float32)

    def _b(k):
        return wscale * jax.random.normal(k, (1, d_model), jnp.float32)

    wq, bq = _w(ks[0]), _b(ks[1])
    wk, bk = _w(ks[2]), _b(ks[3])
    wv, bv = _w(ks[4]), _b(ks[5])
    wo, bo = _w(ks[6]), _b(ks[7])
    params = (wq, bq, wk, bk, wv, bv, wo, bo)

    q = jax.random.normal(ks[8], (B, S, d_model), jnp.float32)
    k = jax.random.normal(ks[9], (B, S, d_model), jnp.float32)
    v = jax.random.normal(ks[10], (B, S, d_model), jnp.float32)

    # Causal look-ahead mask: 1.0 where attention is disallowed (reference
    # convention: logits += mask * -1e9). Batch-invariant -> shipped as (S,S).
    causal = jnp.triu(jnp.ones((S, S), jnp.float32), k=1)

    out = multihead_attention(q, k, v, causal, params, num_heads=num_heads)
    out = jax.block_until_ready(out)

    # ---- pure numpy float64 reference mirroring the PyTorch forward ----
    def ref_forward(q, k, v, mask, params, num_heads):
        q64, k64, v64 = (np.asarray(a, np.float64) for a in (q, k, v))
        m64 = np.asarray(mask, np.float64)
        wq, bq, wk, bk, wv, bv, wo, bo = (np.asarray(p, np.float64) for p in params)
        Bb, Ss, Dd = q64.shape
        dh = Dd // num_heads

        def split(x):
            return x.reshape(Bb, Ss, num_heads, dh).transpose(0, 2, 1, 3)

        Q = split(q64 @ wq + bq)
        K = split(k64 @ wk + bk)
        V = split(v64 @ wv + bv)
        logits = Q @ K.transpose(0, 1, 3, 2) / math.sqrt(dh)
        logits = logits + m64[None, None, :, :] * -1e9
        logits = logits - logits.max(-1, keepdims=True)
        p = np.exp(logits)
        p = p / p.sum(-1, keepdims=True)
        ctx = (p @ V).transpose(0, 2, 1, 3).reshape(Bb, Ss, Dd)
        return ctx @ wo + bo

    ref = ref_forward(q, k, v, causal, params, num_heads)
    # bf16 MXU operands + approx reciprocal -> ~1e-2 level agreement vs f64.
    np.testing.assert_allclose(np.asarray(out, np.float64), ref,
                               rtol=2e-2, atol=2e-2)
    print("KERNEL_OK")
</pallas_src>

<mosaic_0001>
module attributes {stable_mosaic.version = 11 : i64} {
  func.func @_mha_kernel(%arg0: i32, %arg1: memref<1x8x32xbf16, #tpu.memory_space<vmem>>, %arg2: memref<1x8x32xbf16, #tpu.memory_space<vmem>>, %arg3: memref<1x8x32xbf16, #tpu.memory_space<vmem>>, %arg4: memref<8x8xf32, #tpu.memory_space<vmem>>, %arg5: memref<4x32x8xbf16, #tpu.memory_space<vmem>>, %arg6: memref<4x1x8xf32, #tpu.memory_space<vmem>>, %arg7: memref<4x32x8xbf16, #tpu.memory_space<vmem>>, %arg8: memref<4x1x8xf32, #tpu.memory_space<vmem>>, %arg9: memref<4x32x8xbf16, #tpu.memory_space<vmem>>, %arg10: memref<4x1x8xf32, #tpu.memory_space<vmem>>, %arg11: memref<4x8x32xbf16, #tpu.memory_space<vmem>>, %arg12: memref<1x32xf32, #tpu.memory_space<vmem>>, %arg13: memref<1x8x32xf32, #tpu.memory_space<vmem>>, %arg14: memref<8x32xf32, #tpu.memory_space<vmem>>) attributes {dimension_semantics = [#tpu.dimension_semantics<parallel>], iteration_bounds = array<i64: 2>, scalar_prefetch = 0 : i64, scratch_operands = 1 : i64, tpu.core_type = #tpu.core_type<tc>, window_params = [{transform_indices = @transform_0, window_bounds = array<i64: 1, 8, 32>}, {transform_indices = @transform_1, window_bounds = array<i64: 1, 8, 32>}, {transform_indices = @transform_2, window_bounds = array<i64: 1, 8, 32>}, {pipeline_mode = #tpu.pipeline_mode<synchronous>, transform_indices = @transform_3, window_bounds = array<i64: 8, 8>}, {pipeline_mode = #tpu.pipeline_mode<synchronous>, transform_indices = @transform_4, window_bounds = array<i64: 4, 32, 8>}, {pipeline_mode = #tpu.pipeline_mode<synchronous>, transform_indices = @transform_5, window_bounds = array<i64: 4, 1, 8>}, {pipeline_mode = #tpu.pipeline_mode<synchronous>, transform_indices = @transform_6, window_bounds = array<i64: 4, 32, 8>}, {pipeline_mode = #tpu.pipeline_mode<synchronous>, transform_indices = @transform_7, window_bounds = array<i64: 4, 1, 8>}, {pipeline_mode = #tpu.pipeline_mode<synchronous>, transform_indices = @transform_8, window_bounds = array<i64: 4, 32, 8>}, {pipeline_mode = #tpu.pipeline_mode<synchronous>, transform_indices = @transform_9, window_bounds = array<i64: 4, 1, 8>}, {pipeline_mode = #tpu.pipeline_mode<synchronous>, transform_indices = @transform_10, window_bounds = array<i64: 4, 8, 32>}, {pipeline_mode = #tpu.pipeline_mode<synchronous>, transform_indices = @transform_11, window_bounds = array<i64: 1, 32>}, {transform_indices = @transform_12, window_bounds = array<i64: 1, 8, 32>}]} {
    %c0 = arith.constant 0 : index
    %c0_0 = arith.constant 0 : index
    %c0_1 = arith.constant 0 : index
    %0 = vector.load %arg1[%c0, %c0_0, %c0_1] : memref<1x8x32xbf16, #tpu.memory_space<vmem>>, vector<1x8x32xbf16>
    %1 = vector.shape_cast %0 : vector<1x8x32xbf16> to vector<8x32xbf16>
    %c0_2 = arith.constant 0 : index
    %c0_3 = arith.constant 0 : index
    %c0_4 = arith.constant 0 : index
    %2 = vector.load %arg2[%c0_2, %c0_3, %c0_4] : memref<1x8x32xbf16, #tpu.memory_space<vmem>>, vector<1x8x32xbf16>
    %3 = vector.shape_cast %2 : vector<1x8x32xbf16> to vector<8x32xbf16>
    %c0_5 = arith.constant 0 : index
    %c0_6 = arith.constant 0 : index
    %c0_7 = arith.constant 0 : index
    %4 = vector.load %arg3[%c0_5, %c0_6, %c0_7] : memref<1x8x32xbf16, #tpu.memory_space<vmem>>, vector<1x8x32xbf16>
    %5 = vector.shape_cast %4 : vector<1x8x32xbf16> to vector<8x32xbf16>
    %c0_8 = arith.constant 0 : index
    %c0_9 = arith.constant 0 : index
    %6 = vector.load %arg4[%c0_8, %c0_9] : memref<8x8xf32, #tpu.memory_space<vmem>>, vector<8x8xf32>
    %cst = arith.constant 0.000000e+00 : f32
    %7 = vector.broadcast %cst : f32 to vector<8x32xf32>
    %c0_10 = arith.constant 0 : index
    %c0_11 = arith.constant 0 : index
    %8 = vector.load %arg14[%c0_10, %c0_11] : memref<8x32xf32, #tpu.memory_space<vmem>>, vector<8x32xf32>
    tpu.vector_store %arg14[%c0_10, %c0_11], %7 {strides = array<i32>} : memref<8x32xf32, #tpu.memory_space<vmem>>, vector<8x32xf32>,
    %c0_12 = arith.constant 0 : index
    %c0_13 = arith.constant 0 : index
    %c0_14 = arith.constant 0 : index
    %9 = vector.load %arg5[%c0_12, %c0_13, %c0_14] : memref<4x32x8xbf16, #tpu.memory_space<vmem>>, vector<1x32x8xbf16>
    %10 = vector.shape_cast %9 : vector<1x32x8xbf16> to vector<32x8xbf16>
    %cst_15 = arith.constant dense<0.000000e+00> : vector<8x8xf32>
    %11 = tpu.matmul %1, %10, %cst_15 {dimension_numbers = #tpu.dot_dimension_numbers<[1], [0], [0], [1], [0, 0, 1, 1], [], []>} : vector<8x32xbf16>, vector<32x8xbf16>, vector<8x8xf32> -> vector<8x8xf32>
    %c0_16 = arith.constant 0 : index
    %c0_17 = arith.constant 0 : index
    %c0_18 = arith.constant 0 : index
    %12 = vector.load %arg6[%c0_16, %c0_17, %c0_18] : memref<4x1x8xf32, #tpu.memory_space<vmem>>, vector<1x1x8xf32>
    %13 = vector.shape_cast %12 : vector<1x1x8xf32> to vector<1x8xf32>
    %14 = vector.broadcast %13 : vector<1x8xf32> to vector<8x8xf32>
    %15 = arith.addf %11, %14 : vector<8x8xf32>
    %cst_19 = arith.constant 0.353553385 : f32
    %16 = vector.broadcast %cst_19 : f32 to vector<8x8xf32>
    %17 = arith.mulf %15, %16 : vector<8x8xf32>
    %c0_20 = arith.constant 0 : index
    %c0_21 = arith.constant 0 : index
    %c0_22 = arith.constant 0 : index
    %18 = vector.load %arg7[%c0_20, %c0_21, %c0_22] : memref<4x32x8xbf16, #tpu.memory_space<vmem>>, vector<1x32x8xbf16>
    %19 = vector.shape_cast %18 : vector<1x32x8xbf16> to vector<32x8xbf16>
    %cst_23 = arith.constant dense<0.000000e+00> : vector<8x8xf32>
    %20 = tpu.matmul %3, %19, %cst_23 {dimension_numbers = #tpu.dot_dimension_numbers<[1], [0], [0], [1], [0, 0, 1, 1], [], []>} : vector<8x32xbf16>, vector<32x8xbf16>, vector<8x8xf32> -> vector<8x8xf32>
    %c0_24 = arith.constant 0 : index
    %c0_25 = arith.constant 0 : index
    %c0_26 = arith.constant 0 : index
    %21 = vector.load %arg8[%c0_24, %c0_25, %c0_26] : memref<4x1x8xf32, #tpu.memory_space<vmem>>, vector<1x1x8xf32>
    %22 = vector.shape_cast %21 : vector<1x1x8xf32> to vector<1x8xf32>
    %23 = vector.broadcast %22 : vector<1x8xf32> to vector<8x8xf32>
    %24 = arith.addf %20, %23 : vector<8x8xf32>
    %c0_27 = arith.constant 0 : index
    %c0_28 = arith.constant 0 : index
    %c0_29 = arith.constant 0 : index
    %25 = vector.load %arg9[%c0_27, %c0_28, %c0_29] : memref<4x32x8xbf16, #tpu.memory_space<vmem>>, vector<1x32x8xbf16>
    %26 = vector.shape_cast %25 : vector<1x32x8xbf16> to vector<32x8xbf16>
    %cst_30 = arith.constant dense<0.000000e+00> : vector<8x8xf32>
    %27 = tpu.matmul %5, %26, %cst_30 {dimension_numbers = #tpu.dot_dimension_numbers<[1], [0], [0], [1], [0, 0, 1, 1], [], []>} : vector<8x32xbf16>, vector<32x8xbf16>, vector<8x8xf32> -> vector<8x8xf32>
    %c0_31 = arith.constant 0 : index
    %c0_32 = arith.constant 0 : index
    %c0_33 = arith.constant 0 : index
    %28 = vector.load %arg10[%c0_31, %c0_32, %c0_33] : memref<4x1x8xf32, #tpu.memory_space<vmem>>, vector<1x1x8xf32>
    %29 = vector.shape_cast %28 : vector<1x1x8xf32> to vector<1x8xf32>
    %30 = vector.broadcast %29 : vector<1x8xf32> to vector<8x8xf32>
    %31 = arith.addf %27, %30 : vector<8x8xf32>
    %32 = arith.truncf %17 : vector<8x8xf32> to vector<8x8xbf16>
    %33 = arith.truncf %24 : vector<8x8xf32> to vector<8x8xbf16>
    %cst_34 = arith.constant dense<0.000000e+00> : vector<8x8xf32>
    %34 = tpu.matmul %32, %33, %cst_34 {dimension_numbers = #tpu.dot_dimension_numbers<[1], [1], [0], [0], [0, 0, 1, 0], [], []>} : vector<8x8xbf16>, vector<8x8xbf16>, vector<8x8xf32> -> vector<8x8xf32>
    %35 = arith.addf %34, %6 : vector<8x8xf32>
    %cst_35 = arith.constant dense<0xFF800000> : vector<8xf32>
    %36 = vector.multi_reduction <maximumf>, %35, %cst_35 [1] : vector<8x8xf32> to vector<8xf32>
    %37 = vector.shape_cast %36 : vector<8xf32> to vector<8x1xf32>
    %38 = vector.broadcast %37 : vector<8x1xf32> to vector<8x8xf32>
    %39 = arith.subf %35, %38 : vector<8x8xf32>
    %40 = math.exp %39 : vector<8x8xf32>
    %cst_36 = arith.constant dense<0.000000e+00> : vector<8xf32>
    %41 = vector.multi_reduction <add>, %40, %cst_36 [1] : vector<8x8xf32> to vector<8xf32>
    %42 = vector.shape_cast %41 : vector<8xf32> to vector<8x1xf32>
    %43 = arith.truncf %40 : vector<8x8xf32> to vector<8x8xbf16>
    %44 = arith.truncf %31 : vector<8x8xf32> to vector<8x8xbf16>
    %cst_37 = arith.constant dense<0.000000e+00> : vector<8x8xf32>
    %45 = tpu.matmul %43, %44, %cst_37 {dimension_numbers = #tpu.dot_dimension_numbers<[1], [0], [0], [1], [0, 0, 1, 1], [], []>} : vector<8x8xbf16>, vector<8x8xbf16>, vector<8x8xf32> -> vector<8x8xf32>
    %46 = tpu.reciprocal %42 {approx = true} : vector<8x1xf32> -> vector<8x1xf32>
    %47 = vector.broadcast %46 : vector<8x1xf32> to vector<8x8xf32>
    %48 = arith.mulf %45, %47 : vector<8x8xf32>
    %c0_38 = arith.constant 0 : index
    %c0_39 = arith.constant 0 : index
    %49 = vector.load %arg14[%c0_38, %c0_39] : memref<8x32xf32, #tpu.memory_space<vmem>>, vector<8x32xf32>
    %50 = arith.truncf %48 : vector<8x8xf32> to vector<8x8xbf16>
    %c0_40 = arith.constant 0 : index
    %c0_41 = arith.constant 0 : index
    %c0_42 = arith.constant 0 : index
    %51 = vector.load %arg11[%c0_40, %c0_41, %c0_42] : memref<4x8x32xbf16, #tpu.memory_space<vmem>>, vector<1x8x32xbf16>
    %52 = vector.shape_cast %51 : vector<1x8x32xbf16> to vector<8x32xbf16>
    %cst_43 = arith.constant dense<0.000000e+00> : vector<8x32xf32>
    %53 = tpu.matmul %50, %52, %cst_43 {dimension_numbers = #tpu.dot_dimension_numbers<[1], [0], [0], [1], [0, 0, 1, 1], [], []>} : vector<8x8xbf16>, vector<8x32xbf16>, vector<8x32xf32> -> vector<8x32xf32>
    %54 = arith.addf %49, %53 : vector<8x32xf32>
    %c0_44 = arith.constant 0 : index
    %c0_45 = arith.constant 0 : index
    %55 = vector.load %arg14[%c0_44, %c0_45] : memref<8x32xf32, #tpu.memory_space<vmem>>, vector<8x32xf32>
    tpu.vector_store %arg14[%c0_44, %c0_45], %54 {strides = array<i32>} : memref<8x32xf32, #tpu.memory_space<vmem>>, vector<8x32xf32>,
    %c1 = arith.constant 1 : index
    %c0_46 = arith.constant 0 : index
    %c0_47 = arith.constant 0 : index
    %56 = vector.load %arg5[%c1, %c0_46, %c0_47] : memref<4x32x8xbf16, #tpu.memory_space<vmem>>, vector<1x32x8xbf16>
    %57 = vector.shape_cast %56 : vector<1x32x8xbf16> to vector<32x8xbf16>
    %cst_48 = arith.constant dense<0.000000e+00> : vector<8x8xf32>
    %58 = tpu.matmul %1, %57, %cst_48 {dimension_numbers = #tpu.dot_dimension_numbers<[1], [0], [0], [1], [0, 0, 1, 1], [], []>} : vector<8x32xbf16>, vector<32x8xbf16>, vector<8x8xf32> -> vector<8x8xf32>
    %c1_49 = arith.constant 1 : index
    %c0_50 = arith.constant 0 : index
    %c0_51 = arith.constant 0 : index
    %59 = vector.load %arg6[%c1_49, %c0_50, %c0_51] : memref<4x1x8xf32, #tpu.memory_space<vmem>>, vector<1x1x8xf32>
    %60 = vector.shape_cast %59 : vector<1x1x8xf32> to vector<1x8xf32>
    %61 = vector.broadcast %60 : vector<1x8xf32> to vector<8x8xf32>
    %62 = arith.addf %58, %61 : vector<8x8xf32>
    %cst_52 = arith.constant 0.353553385 : f32
    %63 = vector.broadcast %cst_52 : f32 to vector<8x8xf32>
    %64 = arith.mulf %62, %63 : vector<8x8xf32>
    %c1_53 = arith.constant 1 : index
    %c0_54 = arith.constant 0 : index
    %c0_55 = arith.constant 0 : index
    %65 = vector.load %arg7[%c1_53, %c0_54, %c0_55] : memref<4x32x8xbf16, #tpu.memory_space<vmem>>, vector<1x32x8xbf16>
    %66 = vector.shape_cast %65 : vector<1x32x8xbf16> to vector<32x8xbf16>
    %cst_56 = arith.constant dense<0.000000e+00> : vector<8x8xf32>
    %67 = tpu.matmul %3, %66, %cst_56 {dimension_numbers = #tpu.dot_dimension_numbers<[1], [0], [0], [1], [0, 0, 1, 1], [], []>} : vector<8x32xbf16>, vector<32x8xbf16>, vector<8x8xf32> -> vector<8x8xf32>
    %c1_57 = arith.constant 1 : index
    %c0_58 = arith.constant 0 : index
    %c0_59 = arith.constant 0 : index
    %68 = vector.load %arg8[%c1_57, %c0_58, %c0_59] : memref<4x1x8xf32, #tpu.memory_space<vmem>>, vector<1x1x8xf32>
    %69 = vector.shape_cast %68 : vector<1x1x8xf32> to vector<1x8xf32>
    %70 = vector.broadcast %69 : vector<1x8xf32> to vector<8x8xf32>
    %71 = arith.addf %67, %70 : vector<8x8xf32>
    %c1_60 = arith.constant 1 : index
    %c0_61 = arith.constant 0 : index
    %c0_62 = arith.constant 0 : index
    %72 = vector.load %arg9[%c1_60, %c0_61, %c0_62] : memref<4x32x8xbf16, #tpu.memory_space<vmem>>, vector<1x32x8xbf16>
    %73 = vector.shape_cast %72 : vector<1x32x8xbf16> to vector<32x8xbf16>
    %cst_63 = arith.constant dense<0.000000e+00> : vector<8x8xf32>
    %74 = tpu.matmul %5, %73, %cst_63 {dimension_numbers = #tpu.dot_dimension_numbers<[1], [0], [0], [1], [0, 0, 1, 1], [], []>} : vector<8x32xbf16>, vector<32x8xbf16>, vector<8x8xf32> -> vector<8x8xf32>
    %c1_64 = arith.constant 1 : index
    %c0_65 = arith.constant 0 : index
    %c0_66 = arith.constant 0 : index
    %75 = vector.load %arg10[%c1_64, %c0_65, %c0_66] : memref<4x1x8xf32, #tpu.memory_space<vmem>>, vector<1x1x8xf32>
    %76 = vector.shape_cast %75 : vector<1x1x8xf32> to vector<1x8xf32>
    %77 = vector.broadcast %76 : vector<1x8xf32> to vector<8x8xf32>
    %78 = arith.addf %74, %77 : vector<8x8xf32>
    %79 = arith.truncf %64 : vector<8x8xf32> to vector<8x8xbf16>
    %80 = arith.truncf %71 : vector<8x8xf32> to vector<8x8xbf16>
    %cst_67 = arith.constant dense<0.000000e+00> : vector<8x8xf32>
    %81 = tpu.matmul %79, %80, %cst_67 {dimension_numbers = #tpu.dot_dimension_numbers<[1], [1], [0], [0], [0, 0, 1, 0], [], []>} : vector<8x8xbf16>, vector<8x8xbf16>, vector<8x8xf32> -> vector<8x8xf32>
    %82 = arith.addf %81, %6 : vector<8x8xf32>
    %cst_68 = arith.constant dense<0xFF800000> : vector<8xf32>
    %83 = vector.multi_reduction <maximumf>, %82, %cst_68 [1] : vector<8x8xf32> to vector<8xf32>
    %84 = vector.shape_cast %83 : vector<8xf32> to vector<8x1xf32>
    %85 = vector.broadcast %84 : vector<8x1xf32> to vector<8x8xf32>
    %86 = arith.subf %82, %85 : vector<8x8xf32>
    %87 = math.exp %86 : vector<8x8xf32>
    %cst_69 = arith.constant dense<0.000000e+00> : vector<8xf32>
    %88 = vector.multi_reduction <add>, %87, %cst_69 [1] : vector<8x8xf32> to vector<8xf32>
    %89 = vector.shape_cast %88 : vector<8xf32> to vector<8x1xf32>
    %90 = arith.truncf %87 : vector<8x8xf32> to vector<8x8xbf16>
    %91 = arith.truncf %78 : vector<8x8xf32> to vector<8x8xbf16>
    %cst_70 = arith.constant dense<0.000000e+00> : vector<8x8xf32>
    %92 = tpu.matmul %90, %91, %cst_70 {dimension_numbers = #tpu.dot_dimension_numbers<[1], [0], [0], [1], [0, 0, 1, 1], [], []>} : vector<8x8xbf16>, vector<8x8xbf16>, vector<8x8xf32> -> vector<8x8xf32>
    %93 = tpu.reciprocal %89 {approx = true} : vector<8x1xf32> -> vector<8x1xf32>
    %94 = vector.broadcast %93 : vector<8x1xf32> to vector<8x8xf32>
    %95 = arith.mulf %92, %94 : vector<8x8xf32>
    %c0_71 = arith.constant 0 : index
    %c0_72 = arith.constant 0 : index
    %96 = vector.load %arg14[%c0_71, %c0_72] : memref<8x32xf32, #tpu.memory_space<vmem>>, vector<8x32xf32>
    %97 = arith.truncf %95 : vector<8x8xf32> to vector<8x8xbf16>
    %c1_73 = arith.constant 1 : index
    %c0_74 = arith.constant 0 : index
    %c0_75 = arith.constant 0 : index
    %98 = vector.load %arg11[%c1_73, %c0_74, %c0_75] : memref<4x8x32xbf16, #tpu.memory_space<vmem>>, vector<1x8x32xbf16>
    %99 = vector.shape_cast %98 : vector<1x8x32xbf16> to vector<8x32xbf16>
    %cst_76 = arith.constant dense<0.000000e+00> : vector<8x32xf32>
    %100 = tpu.matmul %97, %99, %cst_76 {dimension_numbers = #tpu.dot_dimension_numbers<[1], [0], [0], [1], [0, 0, 1, 1], [], []>} : vector<8x8xbf16>, vector<8x32xbf16>, vector<8x32xf32> -> vector<8x32xf32>
    %101 = arith.addf %96, %100 : vector<8x32xf32>
    %c0_77 = arith.constant 0 : index
    %c0_78 = arith.constant 0 : index
    %102 = vector.load %arg14[%c0_77, %c0_78] : memref<8x32xf32, #tpu.memory_space<vmem>>, vector<8x32xf32>
    tpu.vector_store %arg14[%c0_77, %c0_78], %101 {strides = array<i32>} : memref<8x32xf32, #tpu.memory_space<vmem>>, vector<8x32xf32>,
    %c2 = arith.constant 2 : index
    %c0_79 = arith.constant 0 : index
    %c0_80 = arith.constant 0 : index
    %103 = vector.load %arg5[%c2, %c0_79, %c0_80] : memref<4x32x8xbf16, #tpu.memory_space<vmem>>, vector<1x32x8xbf16>
    %104 = vector.shape_cast %103 : vector<1x32x8xbf16> to vector<32x8xbf16>
    %cst_81 = arith.constant dense<0.000000e+00> : vector<8x8xf32>
    %105 = tpu.matmul %1, %104, %cst_81 {dimension_numbers = #tpu.dot_dimension_numbers<[1], [0], [0], [1], [0, 0, 1, 1], [], []>} : vector<8x32xbf16>, vector<32x8xbf16>, vector<8x8xf32> -> vector<8x8xf32>
    %c2_82 = arith.constant 2 : index
    %c0_83 = arith.constant 0 : index
    %c0_84 = arith.constant 0 : index
    %106 = vector.load %arg6[%c2_82, %c0_83, %c0_84] : memref<4x1x8xf32, #tpu.memory_space<vmem>>, vector<1x1x8xf32>
    %107 = vector.shape_cast %106 : vector<1x1x8xf32> to vector<1x8xf32>
    %108 = vector.broadcast %107 : vector<1x8xf32> to vector<8x8xf32>
    %109 = arith.addf %105, %108 : vector<8x8xf32>
    %cst_85 = arith.constant 0.353553385 : f32
    %110 = vector.broadcast %cst_85 : f32 to vector<8x8xf32>
    %111 = arith.mulf %109, %110 : vector<8x8xf32>
    %c2_86 = arith.constant 2 : index
    %c0_87 = arith.constant 0 : index
    %c0_88 = arith.constant 0 : index
    %112 = vector.load %arg7[%c2_86, %c0_87, %c0_88] : memref<4x32x8xbf16, #tpu.memory_space<vmem>>, vector<1x32x8xbf16>
    %113 = vector.shape_cast %112 : vector<1x32x8xbf16> to vector<32x8xbf16>
    %cst_89 = arith.constant dense<0.000000e+00> : vector<8x8xf32>
    %114 = tpu.matmul %3, %113, %cst_89 {dimension_numbers = #tpu.dot_dimension_numbers<[1], [0], [0], [1], [0, 0, 1, 1], [], []>} : vector<8x32xbf16>, vector<32x8xbf16>, vector<8x8xf32> -> vector<8x8xf32>
    %c2_90 = arith.constant 2 : index
    %c0_91 = arith.constant 0 : index
    %c0_92 = arith.constant 0 : index
    %115 = vector.load %arg8[%c2_90, %c0_91, %c0_92] : memref<4x1x8xf32, #tpu.memory_space<vmem>>, vector<1x1x8xf32>
    %116 = vector.shape_cast %115 : vector<1x1x8xf32> to vector<1x8xf32>
    %117 = vector.broadcast %116 : vector<1x8xf32> to vector<8x8xf32>
    %118 = arith.addf %114, %117 : vector<8x8xf32>
    %c2_93 = arith.constant 2 : index
    %c0_94 = arith.constant 0 : index
    %c0_95 = arith.constant 0 : index
    %119 = vector.load %arg9[%c2_93, %c0_94, %c0_95] : memref<4x32x8xbf16, #tpu.memory_space<vmem>>, vector<1x32x8xbf16>
    %120 = vector.shape_cast %119 : vector<1x32x8xbf16> to vector<32x8xbf16>
    %cst_96 = arith.constant dense<0.000000e+00> : vector<8x8xf32>
    %121 = tpu.matmul %5, %120, %cst_96 {dimension_numbers = #tpu.dot_dimension_numbers<[1], [0], [0], [1], [0, 0, 1, 1], [], []>} : vector<8x32xbf16>, vector<32x8xbf16>, vector<8x8xf32> -> vector<8x8xf32>
    %c2_97 = arith.constant 2 : index
    %c0_98 = arith.constant 0 : index
    %c0_99 = arith.constant 0 : index
    %122 = vector.load %arg10[%c2_97, %c0_98, %c0_99] : memref<4x1x8xf32, #tpu.memory_space<vmem>>, vector<1x1x8xf32>
    %123 = vector.shape_cast %122 : vector<1x1x8xf32> to vector<1x8xf32>
    %124 = vector.broadcast %123 : vector<1x8xf32> to vector<8x8xf32>
    %125 = arith.addf %121, %124 : vector<8x8xf32>
    %126 = arith.truncf %111 : vector<8x8xf32> to vector<8x8xbf16>
    %127 = arith.truncf %118 : vector<8x8xf32> to vector<8x8xbf16>
    %cst_100 = arith.constant dense<0.000000e+00> : vector<8x8xf32>
    %128 = tpu.matmul %126, %127, %cst_100 {dimension_numbers = #tpu.dot_dimension_numbers<[1], [1], [0], [0], [0, 0, 1, 0], [], []>} : vector<8x8xbf16>, vector<8x8xbf16>, vector<8x8xf32> -> vector<8x8xf32>
    %129 = arith.addf %128, %6 : vector<8x8xf32>
    %cst_101 = arith.constant dense<0xFF800000> : vector<8xf32>
    %130 = vector.multi_reduction <maximumf>, %129, %cst_101 [1] : vector<8x8xf32> to vector<8xf32>
    %131 = vector.shape_cast %130 : vector<8xf32> to vector<8x1xf32>
    %132 = vector.broadcast %131 : vector<8x1xf32> to vector<8x8xf32>
    %133 = arith.subf %129, %132 : vector<8x8xf32>
    %134 = math.exp %133 : vector<8x8xf32>
    %cst_102 = arith.constant dense<0.000000e+00> : vector<8xf32>
    %135 = vector.multi_reduction <add>, %134, %cst_102 [1] : vector<8x8xf32> to vector<8xf32>
    %136 = vector.shape_cast %135 : vector<8xf32> to vector<8x1xf32>
    %137 = arith.truncf %134 : vector<8x8xf32> to vector<8x8xbf16>
    %138 = arith.truncf %125 : vector<8x8xf32> to vector<8x8xbf16>
    %cst_103 = arith.constant dense<0.000000e+00> : vector<8x8xf32>
    %139 = tpu.matmul %137, %138, %cst_103 {dimension_numbers = #tpu.dot_dimension_numbers<[1], [0], [0], [1], [0, 0, 1, 1], [], []>} : vector<8x8xbf16>, vector<8x8xbf16>, vector<8x8xf32> -> vector<8x8xf32>
    %140 = tpu.reciprocal %136 {approx = true} : vector<8x1xf32> -> vector<8x1xf32>
    %141 = vector.broadcast %140 : vector<8x1xf32> to vector<8x8xf32>
    %142 = arith.mulf %139, %141 : vector<8x8xf32>
    %c0_104 = arith.constant 0 : index
    %c0_105 = arith.constant 0 : index
    %143 = vector.load %arg14[%c0_104, %c0_105] : memref<8x32xf32, #tpu.memory_space<vmem>>, vector<8x32xf32>
    %144 = arith.truncf %142 : vector<8x8xf32> to vector<8x8xbf16>
    %c2_106 = arith.constant 2 : index
    %c0_107 = arith.constant 0 : index
    %c0_108 = arith.constant 0 : index
    %145 = vector.load %arg11[%c2_106, %c0_107, %c0_108] : memref<4x8x32xbf16, #tpu.memory_space<vmem>>, vector<1x8x32xbf16>
    %146 = vector.shape_cast %145 : vector<1x8x32xbf16> to vector<8x32xbf16>
    %cst_109 = arith.constant dense<0.000000e+00> : vector<8x32xf32>
    %147 = tpu.matmul %144, %146, %cst_109 {dimension_numbers = #tpu.dot_dimension_numbers<[1], [0], [0], [1], [0, 0, 1, 1], [], []>} : vector<8x8xbf16>, vector<8x32xbf16>, vector<8x32xf32> -> vector<8x32xf32>
    %148 = arith.addf %143, %147 : vector<8x32xf32>
    %c0_110 = arith.constant 0 : index
    %c0_111 = arith.constant 0 : index
    %149 = vector.load %arg14[%c0_110, %c0_111] : memref<8x32xf32, #tpu.memory_space<vmem>>, vector<8x32xf32>
    tpu.vector_store %arg14[%c0_110, %c0_111], %148 {strides = array<i32>} : memref<8x32xf32, #tpu.memory_space<vmem>>, vector<8x32xf32>,
    %c3 = arith.constant 3 : index
    %c0_112 = arith.constant 0 : index
    %c0_113 = arith.constant 0 : index
    %150 = vector.load %arg5[%c3, %c0_112, %c0_113] : memref<4x32x8xbf16, #tpu.memory_space<vmem>>, vector<1x32x8xbf16>
    %151 = vector.shape_cast %150 : vector<1x32x8xbf16> to vector<32x8xbf16>
    %cst_114 = arith.constant dense<0.000000e+00> : vector<8x8xf32>
    %152 = tpu.matmul %1, %151, %cst_114 {dimension_numbers = #tpu.dot_dimension_numbers<[1], [0], [0], [1], [0, 0, 1, 1], [], []>} : vector<8x32xbf16>, vector<32x8xbf16>, vector<8x8xf32> -> vector<8x8xf32>
    %c3_115 = arith.constant 3 : index
    %c0_116 = arith.constant 0 : index
    %c0_117 = arith.constant 0 : index
    %153 = vector.load %arg6[%c3_115, %c0_116, %c0_117] : memref<4x1x8xf32, #tpu.memory_space<vmem>>, vector<1x1x8xf32>
    %154 = vector.shape_cast %153 : vector<1x1x8xf32> to vector<1x8xf32>
    %155 = vector.broadcast %154 : vector<1x8xf32> to vector<8x8xf32>
    %156 = arith.addf %152, %155 : vector<8x8xf32>
    %cst_118 = arith.constant 0.353553385 : f32
    %157 = vector.broadcast %cst_118 : f32 to vector<8x8xf32>
    %158 = arith.mulf %156, %157 : vector<8x8xf32>
    %c3_119 = arith.constant 3 : index
    %c0_120 = arith.constant 0 : index
    %c0_121 = arith.constant 0 : index
    %159 = vector.load %arg7[%c3_119, %c0_120, %c0_121] : memref<4x32x8xbf16, #tpu.memory_space<vmem>>, vector<1x32x8xbf16>
    %160 = vector.shape_cast %159 : vector<1x32x8xbf16> to vector<32x8xbf16>
    %cst_122 = arith.constant dense<0.000000e+00> : vector<8x8xf32>
    %161 = tpu.matmul %3, %160, %cst_122 {dimension_numbers = #tpu.dot_dimension_numbers<[1], [0], [0], [1], [0, 0, 1, 1], [], []>} : vector<8x32xbf16>, vector<32x8xbf16>, vector<8x8xf32> -> vector<8x8xf32>
    %c3_123 = arith.constant 3 : index
    %c0_124 = arith.constant 0 : index
    %c0_125 = arith.constant 0 : index
    %162 = vector.load %arg8[%c3_123, %c0_124, %c0_125] : memref<4x1x8xf32, #tpu.memory_space<vmem>>, vector<1x1x8xf32>
    %163 = vector.shape_cast %162 : vector<1x1x8xf32> to vector<1x8xf32>
    %164 = vector.broadcast %163 : vector<1x8xf32> to vector<8x8xf32>
    %165 = arith.addf %161, %164 : vector<8x8xf32>
    %c3_126 = arith.constant 3 : index
    %c0_127 = arith.constant 0 : index
    %c0_128 = arith.constant 0 : index
    %166 = vector.load %arg9[%c3_126, %c0_127, %c0_128] : memref<4x32x8xbf16, #tpu.memory_space<vmem>>, vector<1x32x8xbf16>
    %167 = vector.shape_cast %166 : vector<1x32x8xbf16> to vector<32x8xbf16>
    %cst_129 = arith.constant dense<0.000000e+00> : vector<8x8xf32>
    %168 = tpu.matmul %5, %167, %cst_129 {dimension_numbers = #tpu.dot_dimension_numbers<[1], [0], [0], [1], [0, 0, 1, 1], [], []>} : vector<8x32xbf16>, vector<32x8xbf16>, vector<8x8xf32> -> vector<8x8xf32>
    %c3_130 = arith.constant 3 : index
    %c0_131 = arith.constant 0 : index
    %c0_132 = arith.constant 0 : index
    %169 = vector.load %arg10[%c3_130, %c0_131, %c0_132] : memref<4x1x8xf32, #tpu.memory_space<vmem>>, vector<1x1x8xf32>
    %170 = vector.shape_cast %169 : vector<1x1x8xf32> to vector<1x8xf32>
    %171 = vector.broadcast %170 : vector<1x8xf32> to vector<8x8xf32>
    %172 = arith.addf %168, %171 : vector<8x8xf32>
    %173 = arith.truncf %158 : vector<8x8xf32> to vector<8x8xbf16>
    %174 = arith.truncf %165 : vector<8x8xf32> to vector<8x8xbf16>
    %cst_133 = arith.constant dense<0.000000e+00> : vector<8x8xf32>
    %175 = tpu.matmul %173, %174, %cst_133 {dimension_numbers = #tpu.dot_dimension_numbers<[1], [1], [0], [0], [0, 0, 1, 0], [], []>} : vector<8x8xbf16>, vector<8x8xbf16>, vector<8x8xf32> -> vector<8x8xf32>
    %176 = arith.addf %175, %6 : vector<8x8xf32>
    %cst_134 = arith.constant dense<0xFF800000> : vector<8xf32>
    %177 = vector.multi_reduction <maximumf>, %176, %cst_134 [1] : vector<8x8xf32> to vector<8xf32>
    %178 = vector.shape_cast %177 : vector<8xf32> to vector<8x1xf32>
    %179 = vector.broadcast %178 : vector<8x1xf32> to vector<8x8xf32>
    %180 = arith.subf %176, %179 : vector<8x8xf32>
    %181 = math.exp %180 : vector<8x8xf32>
    %cst_135 = arith.constant dense<0.000000e+00> : vector<8xf32>
    %182 = vector.multi_reduction <add>, %181, %cst_135 [1] : vector<8x8xf32> to vector<8xf32>
    %183 = vector.shape_cast %182 : vector<8xf32> to vector<8x1xf32>
    %184 = arith.truncf %181 : vector<8x8xf32> to vector<8x8xbf16>
    %185 = arith.truncf %172 : vector<8x8xf32> to vector<8x8xbf16>
    %cst_136 = arith.constant dense<0.000000e+00> : vector<8x8xf32>
    %186 = tpu.matmul %184, %185, %cst_136 {dimension_numbers = #tpu.dot_dimension_numbers<[1], [0], [0], [1], [0, 0, 1, 1], [], []>} : vector<8x8xbf16>, vector<8x8xbf16>, vector<8x8xf32> -> vector<8x8xf32>
    %187 = tpu.reciprocal %183 {approx = true} : vector<8x1xf32> -> vector<8x1xf32>
    %188 = vector.broadcast %187 : vector<8x1xf32> to vector<8x8xf32>
    %189 = arith.mulf %186, %188 : vector<8x8xf32>
    %c0_137 = arith.constant 0 : index
    %c0_138 = arith.constant 0 : index
    %190 = vector.load %arg14[%c0_137, %c0_138] : memref<8x32xf32, #tpu.memory_space<vmem>>, vector<8x32xf32>
    %191 = arith.truncf %189 : vector<8x8xf32> to vector<8x8xbf16>
    %c3_139 = arith.constant 3 : index
    %c0_140 = arith.constant 0 : index
    %c0_141 = arith.constant 0 : index
    %192 = vector.load %arg11[%c3_139, %c0_140, %c0_141] : memref<4x8x32xbf16, #tpu.memory_space<vmem>>, vector<1x8x32xbf16>
    %193 = vector.shape_cast %192 : vector<1x8x32xbf16> to vector<8x32xbf16>
    %cst_142 = arith.constant dense<0.000000e+00> : vector<8x32xf32>
    %194 = tpu.matmul %191, %193, %cst_142 {dimension_numbers = #tpu.dot_dimension_numbers<[1], [0], [0], [1], [0, 0, 1, 1], [], []>} : vector<8x8xbf16>, vector<8x32xbf16>, vector<8x32xf32> -> vector<8x32xf32>
    %195 = arith.addf %190, %194 : vector<8x32xf32>
    %c0_143 = arith.constant 0 : index
    %c0_144 = arith.constant 0 : index
    %196 = vector.load %arg14[%c0_143, %c0_144] : memref<8x32xf32, #tpu.memory_space<vmem>>, vector<8x32xf32>
    tpu.vector_store %arg14[%c0_143, %c0_144], %195 {strides = array<i32>} : memref<8x32xf32, #tpu.memory_space<vmem>>, vector<8x32xf32>,
    %c0_145 = arith.constant 0 : index
    %c0_146 = arith.constant 0 : index
    %197 = vector.load %arg14[%c0_145, %c0_146] : memref<8x32xf32, #tpu.memory_space<vmem>>, vector<8x32xf32>
    %c0_147 = arith.constant 0 : index
    %c0_148 = arith.constant 0 : index
    %198 = vector.load %arg12[%c0_147, %c0_148] : memref<1x32xf32, #tpu.memory_space<vmem>>, vector<1x32xf32>
    %199 = vector.broadcast %198 : vector<1x32xf32> to vector<8x32xf32>
    %200 = arith.addf %197, %199 : vector<8x32xf32>
    %c0_149 = arith.constant 0 : index
    %c0_150 = arith.constant 0 : index
    %c0_151 = arith.constant 0 : index
    %201 = vector.load %arg13[%c0_149, %c0_150, %c0_151] : memref<1x8x32xf32, #tpu.memory_space<vmem>>, vector<1x8x32xf32>
    %202 = vector.shape_cast %201 : vector<1x8x32xf32> to vector<8x32xf32>
    %203 = vector.shape_cast %200 : vector<8x32xf32> to vector<1x8x32xf32>
    tpu.vector_store %arg13[%c0_149, %c0_150, %c0_151], %203 {strides = array<i32>} : memref<1x8x32xf32, #tpu.memory_space<vmem>>, vector<1x8x32xf32>,
    return
  }
  func.func @transform_0(%arg0: i32) -> (i32, i32, i32) {
    %c0_i32 = arith.constant 0 : i32
    %c0_i32_0 = arith.constant 0 : i32
    %c0_i32_1 = arith.constant 0 : i32
    return %arg0, %c0_i32, %c0_i32_0 : i32, i32, i32
  }
  func.func @transform_1(%arg0: i32) -> (i32, i32, i32) {
    %c0_i32 = arith.constant 0 : i32
    %c0_i32_0 = arith.constant 0 : i32
    %c0_i32_1 = arith.constant 0 : i32
    return %arg0, %c0_i32, %c0_i32_0 : i32, i32, i32
  }
  func.func @transform_2(%arg0: i32) -> (i32, i32, i32) {
    %c0_i32 = arith.constant 0 : i32
    %c0_i32_0 = arith.constant 0 : i32
    %c0_i32_1 = arith.constant 0 : i32
    return %arg0, %c0_i32, %c0_i32_0 : i32, i32, i32
  }
  func.func @transform_3(%arg0: i32) -> (i32, i32) {
    %c0_i32 = arith.constant 0 : i32
    %c0_i32_0 = arith.constant 0 : i32
    %c0_i32_1 = arith.constant 0 : i32
    return %c0_i32, %c0_i32_0 : i32, i32
  }
  func.func @transform_4(%arg0: i32) -> (i32, i32, i32) {
    %c0_i32 = arith.constant 0 : i32
    %c0_i32_0 = arith.constant 0 : i32
    %c0_i32_1 = arith.constant 0 : i32
    %c0_i32_2 = arith.constant 0 : i32
    return %c0_i32, %c0_i32_0, %c0_i32_1 : i32, i32, i32
  }
  func.func @transform_5(%arg0: i32) -> (i32, i32, i32) {
    %c0_i32 = arith.constant 0 : i32
    %c0_i32_0 = arith.constant 0 : i32
    %c0_i32_1 = arith.constant 0 : i32
    %c0_i32_2 = arith.constant 0 : i32
    return %c0_i32, %c0_i32_0, %c0_i32_1 : i32, i32, i32
  }
  func.func @transform_6(%arg0: i32) -> (i32, i32, i32) {
    %c0_i32 = arith.constant 0 : i32
    %c0_i32_0 = arith.constant 0 : i32
    %c0_i32_1 = arith.constant 0 : i32
    %c0_i32_2 = arith.constant 0 : i32
    return %c0_i32, %c0_i32_0, %c0_i32_1 : i32, i32, i32
  }
  func.func @transform_7(%arg0: i32) -> (i32, i32, i32) {
    %c0_i32 = arith.constant 0 : i32
    %c0_i32_0 = arith.constant 0 : i32
    %c0_i32_1 = arith.constant 0 : i32
    %c0_i32_2 = arith.constant 0 : i32
    return %c0_i32, %c0_i32_0, %c0_i32_1 : i32, i32, i32
  }
  func.func @transform_8(%arg0: i32) -> (i32, i32, i32) {
    %c0_i32 = arith.constant 0 : i32
    %c0_i32_0 = arith.constant 0 : i32
    %c0_i32_1 = arith.constant 0 : i32
    %c0_i32_2 = arith.constant 0 : i32
    return %c0_i32, %c0_i32_0, %c0_i32_1 : i32, i32, i32
  }
  func.func @transform_9(%arg0: i32) -> (i32, i32, i32) {
    %c0_i32 = arith.constant 0 : i32
    %c0_i32_0 = arith.constant 0 : i32
    %c0_i32_1 = arith.constant 0 : i32
    %c0_i32_2 = arith.constant 0 : i32
    return %c0_i32, %c0_i32_0, %c0_i32_1 : i32, i32, i32
  }
  func.func @transform_10(%arg0: i32) -> (i32, i32, i32) {
    %c0_i32 = arith.constant 0 : i32
    %c0_i32_0 = arith.constant 0 : i32
    %c0_i32_1 = arith.constant 0 : i32
    %c0_i32_2 = arith.constant 0 : i32
    return %c0_i32, %c0_i32_0, %c0_i32_1 : i32, i32, i32
  }
  func.func @transform_11(%arg0: i32) -> (i32, i32) {
    %c0_i32 = arith.constant 0 : i32
    %c0_i32_0 = arith.constant 0 : i32
    %c0_i32_1 = arith.constant 0 : i32
    return %c0_i32, %c0_i32_0 : i32, i32
  }
  func.func @transform_12(%arg0: i32) -> (i32, i32, i32) {
    %c0_i32 = arith.constant 0 : i32
    %c0_i32_0 = arith.constant 0 : i32
    %c0_i32_1 = arith.constant 0 : i32
    return %arg0, %c0_i32, %c0_i32_0 : i32, i32, i32
  }
}

</mosaic_0001>

<llo_original>
// kernel: tpu_custom_call.1
$region0: #{tpu_custom_call.1}
  #allocation0 [shape = 'u32[]', space=smem, size = 0x4, offset = 0x4, fixed_abs, tag = 'smem constant byte address 0x4 - core index']
  #allocation1 [shape = 'u32[144,128]{1,0:T(1,128)}', space=vmem, size = 0x12000, scoped, tag = 'internal scratch']
  #allocation2 [shape = 'f32[8,32]{1,0:T(8,128)}', space=vmem, size = 0x1000, scoped, tag = 'scratch operand']
  %s0 = inlined_call_operand.vmem [shape: bf16[2,8,32], index: 0, kind: input, shape index: {}]
  %s1 = inlined_call_operand.vmem [shape: bf16[2,8,32], index: 1, kind: input, shape index: {}]
  %s2 = inlined_call_operand.vmem [shape: bf16[2,8,32], index: 2, kind: input, shape index: {}]
  %s3 = inlined_call_operand.vmem [shape: f32[8,8], index: 3, kind: input, shape index: {}]
  %s4 = inlined_call_operand.vmem [shape: bf16[4,32,8], index: 4, kind: input, shape index: {}]
  %s5 = inlined_call_operand.vmem [shape: f32[4,1,8], index: 5, kind: input, shape index: {}]
  %s6 = inlined_call_operand.vmem [shape: bf16[4,32,8], index: 6, kind: input, shape index: {}]
  %s7 = inlined_call_operand.vmem [shape: f32[4,1,8], index: 7, kind: input, shape index: {}]
  %s8 = inlined_call_operand.vmem [shape: bf16[4,32,8], index: 8, kind: input, shape index: {}]
  %s9 = inlined_call_operand.vmem [shape: f32[4,1,8], index: 9, kind: input, shape index: {}]
  %s10 = inlined_call_operand.vmem [shape: bf16[4,8,32], index: 10, kind: input, shape index: {}]
  %s11 = inlined_call_operand.vmem [shape: f32[1,32], index: 11, kind: input, shape index: {}]
  %s12 = inlined_call_operand.hbm [shape: f32[2,8,32], index: 12, kind: output, shape index: {}]
  %s13 = sld [smem:[#allocation0]]
  $region81: #{tpu_custom_call.1} parent=0
    _
  %s15 = ssub.s32 1, %s13
  %s16 = scalar_select 0, %s15, %s13
  $region1: #{tpu_custom_call.1} parent=0
    #allocation3 [shape = 'u8[8192]{0}', space=vmem, size = 0x2000, scoped, tag = 'output window, operand 0']
    #allocation4 [shape = 's32[2]{0}', space=sflag, size = 0x8, scoped, tag = 'scoped memory for tpu_custom_call.1']
    %17 = vsyncpa [#allocation4], 0
    %s18 = scalar_lea.sflag [#allocation4], 1
    %19 = vsyncpa %s18, 0
    loop: start=0, step=1, limit=4
    $region2: #{tpu_custom_call.1} parent=1 // loop_pre_header
      _
    $region3: #{tpu_custom_call.1} parent=1 // loop_header
      %s21 = sphi 0, %s25
      %p22 = scmp.ge.s32.totalorder %s21, 4
      %s31 = sphi 0, %s33
      %s34 = sphi 0, %s31
      %s35 = sphi 0, %s34
      %s51 = sphi 0, %s35
      %s57 = sphi 0, %s59
      %s60 = sphi 0, %s57
      %s61 = sphi 0, %s60
      %s77 = sphi 0, %s61
      %s83 = sphi 0, %s85
      %s86 = sphi 0, %s83
      %s87 = sphi 0, %s86
      %s103 = sphi 0, %s87
      %s107 = sphi 0, %s107
      %s109 = sphi 0, %s107
      %s110 = sphi 0, %s109
      %s124 = sphi 0, %s110
      %s128 = sphi 0, %s128
      %s130 = sphi 0, %s128
      %s131 = sphi 0, %s130
      %s145 = sphi 0, %s131
      %s149 = sphi 0, %s149
      %s151 = sphi 0, %s149
      %s152 = sphi 0, %s151
      %s166 = sphi 0, %s152
      %s170 = sphi 0, %s170
      %s172 = sphi 0, %s170
      %s173 = sphi 0, %s172
      %s187 = sphi 0, %s173
      %s191 = sphi 0, %s191
      %s193 = sphi 0, %s191
      %s194 = sphi 0, %s193
      %s208 = sphi 0, %s194
      %s212 = sphi 0, %s212
      %s214 = sphi 0, %s212
      %s215 = sphi 0, %s214
      %s229 = sphi 0, %s215
      %s233 = sphi 0, %s233
      %s235 = sphi 0, %s233
      %s236 = sphi 0, %s235
      %s250 = sphi 0, %s236
      %s254 = sphi 0, %s254
      %s256 = sphi 0, %s254
      %s257 = sphi 0, %s256
      %s271 = sphi 0, %s257
      %s275 = sphi 0, %s275
      %s277 = sphi 0, %s275
      %s278 = sphi 0, %s277
      %s292 = sphi 0, %s278
      %s298 = sphi 0, %s300
      %s301 = sphi 0, %s298
      %s302 = sphi 0, %s301
      %s318 = sphi 0, %s302
    $region4: #{tpu_custom_call.1} parent=1 // loop_header_branch
      %24 = sbr.rel (%p22) target = $region8
    $region5: #{tpu_custom_call.1} parent=1 // loop_body
      %s26 = ssub.s32 %s21, 1
      %s27 = ssub.s32 %s21, 2
      %s28 = sadd.s32 %s21, 1
      %s29 = ssub.s32 %s21, %s28
      %p30 = scmp.eq.s32.totalorder %s29, 0
      %s32 = sadd.s32 %s31, 1
      %s33 = scalar_select %p30, %s31, %s32
      %p36 = pneg %p30
      %p37 = scmp.eq.s32.totalorder %s21, 1
      %p38 = por %p36, %p37
      %p39 = scmp.ne.s32.totalorder %s31, %s34
      %p40 = scmp.eq.s32.totalorder %s21, 0
      %p41 = por %p39, %p40
      %p42 = scmp.ne.s32.totalorder %s31, %s34
      %p43 = scmp.eq.s32.totalorder %s26, 1
      %p44 = por %p42, %p43
      %p45 = scmp.ne.s32.totalorder %s34, %s35
      %p46 = scmp.eq.s32.totalorder %s26, 0
      %p47 = por %p45, %p46
      %p48 = scmp.ne.s32.totalorder %s34, %s35
      %p49 = scmp.eq.s32.totalorder %s27, 1
      %p50 = por %p48, %p49
      %p52 = scmp.ne.s32.totalorder %s35, %s51
      %p53 = scmp.eq.s32.totalorder %s27, 0
      %p54 = por %p52, %p53
      %s55 = ssub.s32 %s21, %s28
      %p56 = scmp.eq.s32.totalorder %s55, 0
      %s58 = sadd.s32 %s57, 1
      %s59 = scalar_select %p56, %s57, %s58
      %p62 = pneg %p56
      %p63 = scmp.eq.s32.totalorder %s21, 1
      %p64 = por %p62, %p63
      %p65 = scmp.ne.s32.totalorder %s57, %s60
      %p66 = scmp.eq.s32.totalorder %s21, 0
      %p67 = por %p65, %p66
      %p68 = scmp.ne.s32.totalorder %s57, %s60
      %p69 = scmp.eq.s32.totalorder %s26, 1
      %p70 = por %p68, %p69
      %p71 = scmp.ne.s32.totalorder %s60, %s61
      %p72 = scmp.eq.s32.totalorder %s26, 0
      %p73 = por %p71, %p72
      %p74 = scmp.ne.s32.totalorder %s60, %s61
      %p75 = scmp.eq.s32.totalorder %s27, 1
      %p76 = por %p74, %p75
      %p78 = scmp.ne.s32.totalorder %s61, %s77
      %p79 = scmp.eq.s32.totalorder %s27, 0
      %p80 = por %p78, %p79
      %s81 = ssub.s32 %s21, %s28
      %p82 = scmp.eq.s32.totalorder %s81, 0
      %s84 = sadd.s32 %s83, 1
      %s85 = scalar_select %p82, %s83, %s84
      %p88 = pneg %p82
      %p89 = scmp.eq.s32.totalorder %s21, 1
      %p90 = por %p88, %p89
      %p91 = scmp.ne.s32.totalorder %s83, %s86
      %p92 = scmp.eq.s32.totalorder %s21, 0
      %p93 = por %p91, %p92
      %p94 = scmp.ne.s32.totalorder %s83, %s86
      %p95 = scmp.eq.s32.totalorder %s26, 1
      %p96 = por %p94, %p95
      %p97 = scmp.ne.s32.totalorder %s86, %s87
      %p98 = scmp.eq.s32.totalorder %s26, 0
      %p99 = por %p97, %p98
      %p100 = scmp.ne.s32.totalorder %s86, %s87
      %p101 = scmp.eq.s32.totalorder %s27, 1
      %p102 = por %p100, %p101
      %p104 = scmp.ne.s32.totalorder %s87, %s103
      %p105 = scmp.eq.s32.totalorder %s27, 0
      %p106 = por %p104, %p105
      %s108 = sadd.s32 %s107, 1
      %p111 = scmp.eq.s32.totalorder %s21, 1
      %p112 = scmp.ne.s32.totalorder %s107, %s109
      %p113 = scmp.eq.s32.totalorder %s21, 0
      %p114 = por %p112, %p113
      %p115 = scmp.ne.s32.totalorder %s107, %s109
      %p116 = scmp.eq.s32.totalorder %s26, 1
      %p117 = por %p115, %p116
      %p118 = scmp.ne.s32.totalorder %s109, %s110
      %p119 = scmp.eq.s32.totalorder %s26, 0
      %p120 = por %p118, %p119
      %p121 = scmp.ne.s32.totalorder %s109, %s110
      %p122 = scmp.eq.s32.totalorder %s27, 1
      %p123 = por %p121, %p122
      %p125 = scmp.ne.s32.totalorder %s110, %s124
      %p126 = scmp.eq.s32.totalorder %s27, 0
      %p127 = por %p125, %p126
      %s129 = sadd.s32 %s128, 1
      %p132 = scmp.eq.s32.totalorder %s21, 1
      %p133 = scmp.ne.s32.totalorder %s128, %s130
      %p134 = scmp.eq.s32.totalorder %s21, 0
      %p135 = por %p133, %p134
      %p136 = scmp.ne.s32.totalorder %s128, %s130
      %p137 = scmp.eq.s32.totalorder %s26, 1
      %p138 = por %p136, %p137
      %p139 = scmp.ne.s32.totalorder %s130, %s131
      %p140 = scmp.eq.s32.totalorder %s26, 0
      %p141 = por %p139, %p140
      %p142 = scmp.ne.s32.totalorder %s130, %s131
      %p143 = scmp.eq.s32.totalorder %s27, 1
      %p144 = por %p142, %p143
      %p146 = scmp.ne.s32.totalorder %s131, %s145
      %p147 = scmp.eq.s32.totalorder %s27, 0
      %p148 = por %p146, %p147
      %s150 = sadd.s32 %s149, 1
      %p153 = scmp.eq.s32.totalorder %s21, 1
      %p154 = scmp.ne.s32.totalorder %s149, %s151
      %p155 = scmp.eq.s32.totalorder %s21, 0
      %p156 = por %p154, %p155
      %p157 = scmp.ne.s32.totalorder %s149, %s151
      %p158 = scmp.eq.s32.totalorder %s26, 1
      %p159 = por %p157, %p158
      %p160 = scmp.ne.s32.totalorder %s151, %s152
      %p161 = scmp.eq.s32.totalorder %s26, 0
      %p162 = por %p160, %p161
      %p163 = scmp.ne.s32.totalorder %s151, %s152
      %p164 = scmp.eq.s32.totalorder %s27, 1
      %p165 = por %p163, %p164
      %p167 = scmp.ne.s32.totalorder %s152, %s166
      %p168 = scmp.eq.s32.totalorder %s27, 0
      %p169 = por %p167, %p168
      %s171 = sadd.s32 %s170, 1
      %p174 = scmp.eq.s32.totalorder %s21, 1
      %p175 = scmp.ne.s32.totalorder %s170, %s172
      %p176 = scmp.eq.s32.totalorder %s21, 0
      %p177 = por %p175, %p176
      %p178 = scmp.ne.s32.totalorder %s170, %s172
      %p179 = scmp.eq.s32.totalorder %s26, 1
      %p180 = por %p178, %p179
      %p181 = scmp.ne.s32.totalorder %s172, %s173
      %p182 = scmp.eq.s32.totalorder %s26, 0
      %p183 = por %p181, %p182
      %p184 = scmp.ne.s32.totalorder %s172, %s173
      %p185 = scmp.eq.s32.totalorder %s27, 1
      %p186 = por %p184, %p185
      %p188 = scmp.ne.s32.totalorder %s173, %s187
      %p189 = scmp.eq.s32.totalorder %s27, 0
      %p190 = por %p188, %p189
      %s192 = sadd.s32 %s191, 1
      %p195 = scmp.eq.s32.totalorder %s21, 1
      %p196 = scmp.ne.s32.totalorder %s191, %s193
      %p197 = scmp.eq.s32.totalorder %s21, 0
      %p198 = por %p196, %p197
      %p199 = scmp.ne.s32.totalorder %s191, %s193
      %p200 = scmp.eq.s32.totalorder %s26, 1
      %p201 = por %p199, %p200
      %p202 = scmp.ne.s32.totalorder %s193, %s194
      %p203 = scmp.eq.s32.totalorder %s26, 0
      %p204 = por %p202, %p203
      %p205 = scmp.ne.s32.totalorder %s193, %s194
      %p206 = scmp.eq.s32.totalorder %s27, 1
      %p207 = por %p205, %p206
      %p209 = scmp.ne.s32.totalorder %s194, %s208
      %p210 = scmp.eq.s32.totalorder %s27, 0
      %p211 = por %p209, %p210
      %s213 = sadd.s32 %s212, 1
      %p216 = scmp.eq.s32.totalorder %s21, 1
      %p217 = scmp.ne.s32.totalorder %s212, %s214
      %p218 = scmp.eq.s32.totalorder %s21, 0
      %p219 = por %p217, %p218
      %p220 = scmp.ne.s32.totalorder %s212, %s214
      %p221 = scmp.eq.s32.totalorder %s26, 1
      %p222 = por %p220, %p221
      %p223 = scmp.ne.s32.totalorder %s214, %s215
      %p224 = scmp.eq.s32.totalorder %s26, 0
      %p225 = por %p223, %p224
      %p226 = scmp.ne.s32.totalorder %s214, %s215
      %p227 = scmp.eq.s32.totalorder %s27, 1
      %p228 = por %p226, %p227
      %p230 = scmp.ne.s32.totalorder %s215, %s229
      %p231 = scmp.eq.s32.totalorder %s27, 0
      %p232 = por %p230, %p231
      %s234 = sadd.s32 %s233, 1
      %p237 = scmp.eq.s32.totalorder %s21, 1
      %p238 = scmp.ne.s32.totalorder %s233, %s235
      %p239 = scmp.eq.s32.totalorder %s21, 0
      %p240 = por %p238, %p239
      %p241 = scmp.ne.s32.totalorder %s233, %s235
      %p242 = scmp.eq.s32.totalorder %s26, 1
      %p243 = por %p241, %p242
      %p244 = scmp.ne.s32.totalorder %s235, %s236
      %p245 = scmp.eq.s32.totalorder %s26, 0
      %p246 = por %p244, %p245
      %p247 = scmp.ne.s32.totalorder %s235, %s236
      %p248 = scmp.eq.s32.totalorder %s27, 1
      %p249 = por %p247, %p248
      %p251 = scmp.ne.s32.totalorder %s236, %s250
      %p252 = scmp.eq.s32.totalorder %s27, 0
      %p253 = por %p251, %p252
      %s255 = sadd.s32 %s254, 1
      %p258 = scmp.eq.s32.totalorder %s21, 1
      %p259 = scmp.ne.s32.totalorder %s254, %s256
      %p260 = scmp.eq.s32.totalorder %s21, 0
      %p261 = por %p259, %p260
      %p262 = scmp.ne.s32.totalorder %s254, %s256
      %p263 = scmp.eq.s32.totalorder %s26, 1
      %p264 = por %p262, %p263
      %p265 = scmp.ne.s32.totalorder %s256, %s257
      %p266 = scmp.eq.s32.totalorder %s26, 0
      %p267 = por %p265, %p266
      %p268 = scmp.ne.s32.totalorder %s256, %s257
      %p269 = scmp.eq.s32.totalorder %s27, 1
      %p270 = por %p268, %p269
      %p272 = scmp.ne.s32.totalorder %s257, %s271
      %p273 = scmp.eq.s32.totalorder %s27, 0
      %p274 = por %p272, %p273
      %s276 = sadd.s32 %s275, 1
      %p279 = scmp.eq.s32.totalorder %s21, 1
      %p280 = scmp.ne.s32.totalorder %s275, %s277
      %p281 = scmp.eq.s32.totalorder %s21, 0
      %p282 = por %p280, %p281
      %p283 = scmp.ne.s32.totalorder %s275, %s277
      %p284 = scmp.eq.s32.totalorder %s26, 1
      %p285 = por %p283, %p284
      %p286 = scmp.ne.s32.totalorder %s277, %s278
      %p287 = scmp.eq.s32.totalorder %s26, 0
      %p288 = por %p286, %p287
      %p289 = scmp.ne.s32.totalorder %s277, %s278
      %p290 = scmp.eq.s32.totalorder %s27, 1
      %p291 = por %p289, %p290
      %p293 = scmp.ne.s32.totalorder %s278, %s292
      %p294 = scmp.eq.s32.totalorder %s27, 0
      %p295 = por %p293, %p294
      %s296 = ssub.s32 %s21, %s28
      %p297 = scmp.eq.s32.totalorder %s296, 0
      %s299 = sadd.s32 %s298, 1
      %s300 = scalar_select %p297, %s298, %s299
      %p303 = pneg %p297
      %p304 = scmp.eq.s32.totalorder %s21, 1
      %p305 = por %p303, %p304
      %p306 = scmp.ne.s32.totalorder %s298, %s301
      %p307 = scmp.eq.s32.totalorder %s21, 0
      %p308 = por %p306, %p307
      %p309 = scmp.ne.s32.totalorder %s298, %s301
      %p310 = scmp.eq.s32.totalorder %s26, 1
      %p311 = por %p309, %p310
      %p312 = scmp.ne.s32.totalorder %s301, %s302
      %p313 = scmp.eq.s32.totalorder %s26, 0
      %p314 = por %p312, %p313
      %p315 = scmp.ne.s32.totalorder %s301, %s302
      %p316 = scmp.eq.s32.totalorder %s27, 1
      %p317 = por %p315, %p316
      %p319 = scmp.ne.s32.totalorder %s302, %s318
      %p320 = scmp.eq.s32.totalorder %s27, 0
      %p321 = por %p319, %p320
      %p322 = scmp.le.s32.totalorder 1, %s21
      %p323 = scmp.lt.s32.totalorder %s21, 3
      %p324 = pnand %p322, %p323
      %p325 = pneg %p324
      // Predicated region
      $region9: #{tpu_custom_call.1} parent=5 // pred_check
        _
      $region10: #{tpu_custom_call.1} parent=5 // pred_check_branch
        %327 = sbr.rel (%p324) target = $region12
      $region11: #{tpu_custom_call.1} parent=5 // pred_region
        %s328 = ssub.s32 %s21, 1
        // Predicated region
        $region13: #{tpu_custom_call.1} parent=11 // pred_check
          %p329 = pneg %p120
        $region14: #{tpu_custom_call.1} parent=11 // pred_check_branch
          %331 = sbr.rel (%p329) target = $region16
        $region15: #{tpu_custom_call.1} parent=11 // pred_region
          _
        $region16: #{tpu_custom_call.1} parent=11 // pred_fallthru
          _
        // Predicated region
        $region17: #{tpu_custom_call.1} parent=11 // pred_check
          %p332 = pneg %p141
        $region18: #{tpu_custom_call.1} parent=11 // pred_check_branch
          %334 = sbr.rel (%p332) target = $region20
        $region19: #{tpu_custom_call.1} parent=11 // pred_region
          _
        $region20: #{tpu_custom_call.1} parent=11 // pred_fallthru
          _
        // Predicated region
        $region21: #{tpu_custom_call.1} parent=11 // pred_check
          %p335 = pneg %p162
        $region22: #{tpu_custom_call.1} parent=11 // pred_check_branch
          %337 = sbr.rel (%p335) target = $region24
        $region23: #{tpu_custom_call.1} parent=11 // pred_region
          _
        $region24: #{tpu_custom_call.1} parent=11 // pred_fallthru
          _
        // Predicated region
        $region25: #{tpu_custom_call.1} parent=11 // pred_check
          %p338 = pneg %p183
        $region26: #{tpu_custom_call.1} parent=11 // pred_check_branch
          %340 = sbr.rel (%p338) target = $region28
        $region27: #{tpu_custom_call.1} parent=11 // pred_region
          _
        $region28: #{tpu_custom_call.1} parent=11 // pred_fallthru
          _
        // Predicated region
        $region29: #{tpu_custom_call.1} parent=11 // pred_check
          %p341 = pneg %p204
        $region30: #{tpu_custom_call.1} parent=11 // pred_check_branch
          %343 = sbr.rel (%p341) target = $region32
        $region31: #{tpu_custom_call.1} parent=11 // pred_region
          _
        $region32: #{tpu_custom_call.1} parent=11 // pred_fallthru
          _
        // Predicated region
        $region33: #{tpu_custom_call.1} parent=11 // pred_check
          %p344 = pneg %p225
        $region34: #{tpu_custom_call.1} parent=11 // pred_check_branch
          %346 = sbr.rel (%p344) target = $region36
        $region35: #{tpu_custom_call.1} parent=11 // pred_region
          _
        $region36: #{tpu_custom_call.1} parent=11 // pred_fallthru
          _
        // Predicated region
        $region37: #{tpu_custom_call.1} parent=11 // pred_check
          %p347 = pneg %p246
        $region38: #{tpu_custom_call.1} parent=11 // pred_check_branch
          %349 = sbr.rel (%p347) target = $region40
        $region39: #{tpu_custom_call.1} parent=11 // pred_region
          _
        $region40: #{tpu_custom_call.1} parent=11 // pred_fallthru
          _
        // Predicated region
        $region41: #{tpu_custom_call.1} parent=11 // pred_check
          %p350 = pneg %p267
        $region42: #{tpu_custom_call.1} parent=11 // pred_check_branch
          %352 = sbr.rel (%p350) target = $region44
        $region43: #{tpu_custom_call.1} parent=11 // pred_region
          _
        $region44: #{tpu_custom_call.1} parent=11 // pred_fallthru
          _
        // Predicated region
        $region45: #{tpu_custom_call.1} parent=11 // pred_check
          %p353 = pneg %p288
        $region46: #{tpu_custom_call.1} parent=11 // pred_check_branch
          %355 = sbr.rel (%p353) target = $region48
        $region47: #{tpu_custom_call.1} parent=11 // pred_region
          _
        $region48: #{tpu_custom_call.1} parent=11 // pred_fallthru
          _
      $region12: #{tpu_custom_call.1} parent=5 // pred_fallthru
        _
      %p356 = scmp.lt.s32.totalorder %s21, 2
      // Predicated region
      $region49: #{tpu_custom_call.1} parent=5 // pred_check
        %p357 = pneg %p356
      $region50: #{tpu_custom_call.1} parent=5 // pred_check_branch
        %359 = sbr.rel (%p357) target = $region52
      $region51: #{tpu_custom_call.1} parent=5 // pred_region
        // Predicated region
        $region53: #{tpu_custom_call.1} parent=51 // pred_check
          %p360 = pneg %p41
        $region54: #{tpu_custom_call.1} parent=51 // pred_check_branch
          %362 = sbr.rel (%p360) target = $region56
        $region55: #{tpu_custom_call.1} parent=51 // pred_region
          %p363 = scmp.lt.s32.totalorder %s21, 1
          %s364 = scalar_select %p363, %s21, 1
          %s365 = smul.addr %s364, 4
          %s366 = scalar_lea.vmem %s0, %s365
        $region56: #{tpu_custom_call.1} parent=51 // pred_fallthru
          _
        // Predicated region
        $region57: #{tpu_custom_call.1} parent=51 // pred_check
          %p367 = pneg %p67
        $region58: #{tpu_custom_call.1} parent=51 // pred_check_branch
          %369 = sbr.rel (%p367) target = $region60
        $region59: #{tpu_custom_call.1} parent=51 // pred_region
          %p370 = scmp.lt.s32.totalorder %s21, 1
          %s371 = scalar_select %p370, %s21, 1
          %s372 = smul.addr %s371, 4
          %s373 = scalar_lea.vmem %s1, %s372
        $region60: #{tpu_custom_call.1} parent=51 // pred_fallthru
          _
        // Predicated region
        $region61: #{tpu_custom_call.1} parent=51 // pred_check
          %p374 = pneg %p93
        $region62: #{tpu_custom_call.1} parent=51 // pred_check_branch
          %376 = sbr.rel (%p374) target = $region64
        $region63: #{tpu_custom_call.1} parent=51 // pred_region
          %p377 = scmp.lt.s32.totalorder %s21, 1
          %s378 = scalar_select %p377, %s21, 1
          %s379 = smul.addr %s378, 4
          %s380 = scalar_lea.vmem %s2, %s379
        $region64: #{tpu_custom_call.1} parent=51 // pred_fallthru
          _
      $region52: #{tpu_custom_call.1} parent=5 // pred_fallthru
        _
      %p381 = scmp.le.s32.totalorder 1, %s21
      %p382 = scmp.lt.s32.totalorder %s21, 3
      %p383 = pnand %p381, %p382
      %p384 = pneg %p383
      // Predicated region
      $region65: #{tpu_custom_call.1} parent=5 // pred_check
        _
      $region66: #{tpu_custom_call.1} parent=5 // pred_check_branch
        %386 = sbr.rel (%p383) target = $region68
      $region67: #{tpu_custom_call.1} parent=5 // pred_region
        %s387 = ssub.s32 %s21, 1
        %p388 = scmp.lt.s32.totalorder %s26, 1
        %s389 = scalar_select %p388, %s26, 1
        %s390 = smul.addr %s389, 4
        %s391 = scalar_lea.vmem %s0, %s390
        %p392 = pneg %p47
        %p393 = pneg %p44
        %p394 = scmp.lt.s32.totalorder %s26, 1
        %s395 = scalar_select %p394, %s26, 1
        %s396 = smul.addr %s395, 4
        %s397 = scalar_lea.vmem %s1, %s396
        %p398 = pneg %p73
        %p399 = pneg %p70
        %p400 = scmp.lt.s32.totalorder %s26, 1
        %s401 = scalar_select %p400, %s26, 1
        %s402 = smul.addr %s401, 4
        %s403 = scalar_lea.vmem %s2, %s402
        %p404 = pneg %p99
        %p405 = pneg %p96
        %p406 = pneg %p120
        %p407 = pneg %p117
        %p408 = pneg %p141
        %p409 = pneg %p138
        %p410 = pneg %p162
        %p411 = pneg %p159
        %p412 = pneg %p183
        %p413 = pneg %p180
        %p414 = pneg %p204
        %p415 = pneg %p201
        %p416 = pneg %p225
        %p417 = pneg %p222
        %p418 = pneg %p246
        %p419 = pneg %p243
        %p420 = pneg %p267
        %p421 = pneg %p264
        %p422 = pneg %p288
        %p423 = pneg %p285
        %p424 = pneg %p314
        %p425 = pneg %p311
        %s426 = sand.u32 %s301, 1
        %s427 = scalar_lea.sflag [#allocation4], %s426
        %s428 = sand.u32 %s301, 1
        %s429 = smul.addr %s428, 8
        %s430 = scalar_lea.vmem [#allocation3], %s429
        %p431 = scmp.lt.s32.totalorder %s26, 1
        %s432 = scalar_select %p431, %s26, 1
        %s433 = smul.addr %s432, 4
        %s434 = scalar_lea.vmem %s0, %s433
        %p435 = scmp.lt.s32.totalorder %s26, 1
        %s436 = scalar_select %p435, %s26, 1
        %s437 = smul.addr %s436, 4
        %s438 = scalar_lea.vmem %s1, %s437
        %p439 = scmp.lt.s32.totalorder %s26, 1
        %s440 = scalar_select %p439, %s26, 1
        %s441 = smul.addr %s440, 4
        %s442 = scalar_lea.vmem %s2, %s441
        %v444 = vld [vmem:[%s434] sm:$0xf]
        %v445 = vld [vmem:[%s438] sm:$0xf]
        %v446 = vld [vmem:[%s442] sm:$0xf]
        %v447 = vld [vmem:[%s3] sm:$0xff]
        %vm448 = vcmask 261120
        %449 = vst.msk [vmem:[#allocation2] sm:$0xff] %vm448, 0.0
        %v450 = vld [vmem:[%s4] sm:$0xf]
        %v451 = vld [vmem:[%s4 + $0x4] sm:$0xf]
        %v452 = vld [vmem:[%s4 + $0x8] sm:$0xf]
        %v453 = vld [vmem:[%s4 + $0xc] sm:$0xf]
        %v454 = vld [vmem:[%s5] sm:$0x1]
        %v456 = vlaneseq
        %v457 = vshrl.u32 %v456, 7
        %v458 = vsub.s32 0, %v457
        %v459 = vrot.slane %v454, %v458
        %v465 = vunpack.c.l.b16 %v450
        %v466 = vunpack.c.l.b16 %v451
        %v467 = vunpack.c.l.b16 %v452
        %v468 = vunpack.c.l.b16 %v453
        %v469 = vpack.c.b16 %v466, %v465
        %v470 = vpack.c.b16 %v468, %v467
        %v474 = vsel %vm448, %v444, 0
        %476 = vmatprep.subr.bf16.mxu0 0
        %477 = vmatpush1.bf16.msra.mxu0 0
        %478 = vmatprep.subr.bf16.mxu0 0
        %479 = vmatpush1.bf16.msra.mxu0 0
        %480 = vmatprep.subr.bf16.mxu0 0
        %481 = vmatpush1.bf16.msra.mxu0 0
        %482 = vmatprep.subr.bf16.mxu0 0
        %483 = vmatpush1.bf16.msra.mxu0 0
        %484 = vmatprep.subr.bf16.mxu0 0
        %485 = vmatpush1.bf16.msra.mxu0 0
        %486 = vmatprep.subr.bf16.mxu0 0
        %487 = vmatpush1.bf16.msra.mxu0 0
        %488 = vmatprep.subr.bf16.mxu0 0
        %489 = vmatpush1.bf16.msra.mxu0 %v470
        %490 = vmatprep.subr.bf16.mxu0 0
        %491 = vmatpush1.bf16.msra.mxu0 %v469
        %492 = vmatprep.subr.bf16.mxu0 0
        %493 = vmatpush2.bf16.msra.mxu0 0
        %494 = vmatprep.subr.bf16.mxu0 0
        %495 = vmatpush2.bf16.msra.mxu0 0
        %496 = vmatprep.subr.bf16.mxu0 0
        %497 = vmatpush2.bf16.msra.mxu0 0
        %498 = vmatprep.subr.bf16.mxu0 0
        %499 = vmatpush2.bf16.msra.mxu0 0
        %500 = vmatprep.subr.bf16.mxu0 0
        %501 = vmatpush2.bf16.msra.mxu0 0
        %502 = vmatprep.subr.bf16.mxu0 0
        %503 = vmatpush2.bf16.msra.mxu0 0
        %504 = vmatprep.subr.bf16.mxu0 0
        %505 = vmatpush2.bf16.msra.mxu0 0
        %506 = vmatprep.subr.bf16.mxu0 0
        %507 = vmatpush2.bf16.msra.mxu0 0
        %508 = vmatprep.mubr.bf16.mxu0 0
        %509 = vmatmul.mubr.bf16.gmra.mxu0 %v474
        %v510 = vpop.f32.mrf.mxu0
        %v511 = vadd.f32 %v459, %v510
        %v512 = vpop.f32.mrf.mxu0
        %v513 = vpop.f32.mrf.mxu0
        %v514 = vpop.f32.mrf.mxu0
        %515 = vdwg.mxu0
        %v516 = vmul.f32 %v511, 0.35355338
        %v517 = vld [vmem:[%s6] sm:$0xf]
        %v518 = vld [vmem:[%s6 + $0x4] sm:$0xf]
        %v519 = vld [vmem:[%s6 + $0x8] sm:$0xf]
        %v520 = vld [vmem:[%s6 + $0xc] sm:$0xf]
        %v521 = vld [vmem:[%s7] sm:$0x1]
        %v523 = vlaneseq
        %v524 = vshrl.u32 %v523, 7
        %v525 = vsub.s32 0, %v524
        %v526 = vrot.slane %v521, %v525
        %v532 = vunpack.c.l.b16 %v517
        %v533 = vunpack.c.l.b16 %v518
        %v534 = vunpack.c.l.b16 %v519
        %v535 = vunpack.c.l.b16 %v520
        %v536 = vpack.c.b16 %v533, %v532
        %v537 = vpack.c.b16 %v535, %v534
        %v541 = vsel %vm448, %v445, 0
        %543 = vmatprep.subr.bf16.mxu0 0
        %544 = vmatpush1.bf16.msra.mxu0 0
        %545 = vmatprep.subr.bf16.mxu0 0
        %546 = vmatpush1.bf16.msra.mxu0 0
        %547 = vmatprep.subr.bf16.mxu0 0
        %548 = vmatpush1.bf16.msra.mxu0 0
        %549 = vmatprep.subr.bf16.mxu0 0
        %550 = vmatpush1.bf16.msra.mxu0 0
        %551 = vmatprep.subr.bf16.mxu0 0
        %552 = vmatpush1.bf16.msra.mxu0 0
        %553 = vmatprep.subr.bf16.mxu0 0
        %554 = vmatpush1.bf16.msra.mxu0 0
        %555 = vmatprep.subr.bf16.mxu0 0
        %556 = vmatpush1.bf16.msra.mxu0 %v537
        %557 = vmatprep.subr.bf16.mxu0 0
        %558 = vmatpush1.bf16.msra.mxu0 %v536
        %559 = vmatprep.subr.bf16.mxu0 0
        %560 = vmatpush2.bf16.msra.mxu0 0
        %561 = vmatprep.subr.bf16.mxu0 0
        %562 = vmatpush2.bf16.msra.mxu0 0
        %563 = vmatprep.subr.bf16.mxu0 0
        %564 = vmatpush2.bf16.msra.mxu0 0
        %565 = vmatprep.subr.bf16.mxu0 0
        %566 = vmatpush2.bf16.msra.mxu0 0
        %567 = vmatprep.subr.bf16.mxu0 0
        %568 = vmatpush2.bf16.msra.mxu0 0
        %569 = vmatprep.subr.bf16.mxu0 0
        %570 = vmatpush2.bf16.msra.mxu0 0
        %571 = vmatprep.subr.bf16.mxu0 0
        %572 = vmatpush2.bf16.msra.mxu0 0
        %573 = vmatprep.subr.bf16.mxu0 0
        %574 = vmatpush2.bf16.msra.mxu0 0
        %575 = vmatprep.mubr.bf16.mxu0 0
        %576 = vmatmul.mubr.bf16.gmra.mxu0 %v541
        %v577 = vpop.f32.mrf.mxu0
        %v578 = vadd.f32 %v526, %v577
        %v579 = vpop.f32.mrf.mxu0
        %v580 = vpop.f32.mrf.mxu0
        %v581 = vpop.f32.mrf.mxu0
        %582 = vdwg.mxu0
        %v583 = vld [vmem:[%s8] sm:$0xf]
        %v584 = vld [vmem:[%s8 + $0x4] sm:$0xf]
        %v585 = vld [vmem:[%s8 + $0x8] sm:$0xf]
        %v586 = vld [vmem:[%s8 + $0xc] sm:$0xf]
        %v587 = vld [vmem:[%s9] sm:$0x1]
        %v589 = vlaneseq
        %v590 = vshrl.u32 %v589, 7
        %v591 = vsub.s32 0, %v590
        %v592 = vrot.slane %v587, %v591
        %v598 = vunpack.c.l.b16 %v583
        %v599 = vunpack.c.l.b16 %v584
        %v600 = vunpack.c.l.b16 %v585
        %v601 = vunpack.c.l.b16 %v586
        %v602 = vpack.c.b16 %v599, %v598
        %v603 = vpack.c.b16 %v601, %v600
        %v607 = vsel %vm448, %v446, 0
        %609 = vmatprep.subr.bf16.mxu0 0
        %610 = vmatpush1.bf16.msra.mxu0 0
        %611 = vmatprep.subr.bf16.mxu0 0
        %612 = vmatpush1.bf16.msra.mxu0 0
        %613 = vmatprep.subr.bf16.mxu0 0
        %614 = vmatpush1.bf16.msra.mxu0 0
        %615 = vmatprep.subr.bf16.mxu0 0
        %616 = vmatpush1.bf16.msra.mxu0 0
        %617 = vmatprep.subr.bf16.mxu0 0
        %618 = vmatpush1.bf16.msra.mxu0 0
        %619 = vmatprep.subr.bf16.mxu0 0
        %620 = vmatpush1.bf16.msra.mxu0 0
        %621 = vmatprep.subr.bf16.mxu0 0
        %622 = vmatpush1.bf16.msra.mxu0 %v603
        %623 = vmatprep.subr.bf16.mxu0 0
        %624 = vmatpush1.bf16.msra.mxu0 %v602
        %625 = vmatprep.subr.bf16.mxu0 0
        %626 = vmatpush2.bf16.msra.mxu0 0
        %627 = vmatprep.subr.bf16.mxu0 0
        %628 = vmatpush2.bf16.msra.mxu0 0
        %629 = vmatprep.subr.bf16.mxu0 0
        %630 = vmatpush2.bf16.msra.mxu0 0
        %631 = vmatprep.subr.bf16.mxu0 0
        %632 = vmatpush2.bf16.msra.mxu0 0
        %633 = vmatprep.subr.bf16.mxu0 0
        %634 = vmatpush2.bf16.msra.mxu0 0
        %635 = vmatprep.subr.bf16.mxu0 0
        %636 = vmatpush2.bf16.msra.mxu0 0
        %637 = vmatprep.subr.bf16.mxu0 0
        %638 = vmatpush2.bf16.msra.mxu0 0
        %639 = vmatprep.subr.bf16.mxu0 0
        %640 = vmatpush2.bf16.msra.mxu0 0
        %641 = vmatprep.mubr.bf16.mxu0 0
        %642 = vmatmul.mubr.bf16.gmra.mxu0 %v607
        %v643 = vpop.f32.mrf.mxu0
        %v644 = vadd.f32 %v592, %v643
        %v645 = vpop.f32.mrf.mxu0
        %v646 = vpop.f32.mrf.mxu0
        %v647 = vpop.f32.mrf.mxu0
        %648 = vdwg.mxu0
        %v649 = vpack.c.bf16 %v516, %v516
        %v650 = vpack.c.bf16 %v578, %v578
        %vm651 = vcmask 64512
        %v653 = vsel %vm651, %v649, 0
        %v656 = vsel %vm651, %v650, 0
        %658 = vmatprep.subr.bf16.mxu0 0
        %659 = vmatpush1.bf16.xpose.msra.mxu0 0
        %660 = vmatprep.subr.bf16.mxu0 0
        %661 = vmatpush1.bf16.xpose.msra.mxu0 0
        %662 = vmatprep.subr.bf16.mxu0 0
        %663 = vmatpush1.bf16.xpose.msra.mxu0 0
        %664 = vmatprep.subr.bf16.mxu0 0
        %665 = vmatpush1.bf16.xpose.msra.mxu0 0
        %666 = vmatprep.subr.bf16.mxu0 0
        %667 = vmatpush1.bf16.xpose.msra.mxu0 0
        %668 = vmatprep.subr.bf16.mxu0 0
        %669 = vmatpush1.bf16.xpose.msra.mxu0 0
        %670 = vmatprep.subr.bf16.mxu0 0
        %671 = vmatpush1.bf16.xpose.msra.mxu0 0
        %672 = vmatprep.subr.bf16.mxu0 0
        %673 = vmatpush1.bf16.xpose.msra.mxu0 %v656
        %674 = vmatprep.subr.bf16.mxu0 0
        %675 = vmatpush2.bf16.xpose.msra.mxu0 0
        %676 = vmatprep.subr.bf16.mxu0 0
        %677 = vmatpush2.bf16.xpose.msra.mxu0 0
        %678 = vmatprep.subr.bf16.mxu0 0
        %679 = vmatpush2.bf16.xpose.msra.mxu0 0
        %680 = vmatprep.subr.bf16.mxu0 0
        %681 = vmatpush2.bf16.xpose.msra.mxu0 0
        %682 = vmatprep.subr.bf16.mxu0 0
        %683 = vmatpush2.bf16.xpose.msra.mxu0 0
        %684 = vmatprep.subr.bf16.mxu0 0
        %685 = vmatpush2.bf16.xpose.msra.mxu0 0
        %686 = vmatprep.subr.bf16.mxu0 0
        %687 = vmatpush2.bf16.xpose.msra.mxu0 0
        %688 = vmatprep.subr.bf16.mxu0 0
        %689 = vmatpush2.bf16.xpose.msra.mxu0 0
        %690 = vmatprep.mubr.bf16.mxu0 0
        %691 = vmatmul.mubr.bf16.gmra.mxu0 %v653
        %v692 = vpop.f32.mrf.mxu0
        %v693 = vadd.f32 %v447, %v692
        %v694 = vpop.f32.mrf.mxu0
        %v695 = vpop.f32.mrf.mxu0
        %v696 = vpop.f32.mrf.mxu0
        %697 = vdwg.mxu0
        %v698 = vsel %vm651, %v693, -inf
        %699 = vmax.xlane.f32.xlu0 %v698
        %v700 = vpop.xlane.xlu0 %699
        %v701 = vsub.f32 %v693, %v700
        %v702 = vmul.f32 %v701, 1.442695
        %v703 = vpow.pop %v702
        %v704 = vsel %vm651, %v703, 0.0
        %705 = vadd.xlane.f32.xlu0 %v704
        %v706 = vpop.xlane.xlu0 %705
        %v707 = vpack.c.bf16 %v703, %v703
        %v708 = vpack.c.bf16 %v644, %v644
        %v710 = vsel %vm651, %v707, 0
        %vm712 = vcmask 1043456
        %v714 = vsel %vm712, %v708, 0
        %716 = vmatprep.subr.bf16.mxu0 0
        %717 = vmatpush1.bf16.msra.mxu0 0
        %718 = vmatprep.subr.bf16.mxu0 0
        %719 = vmatpush1.bf16.msra.mxu0 0
        %720 = vmatprep.subr.bf16.mxu0 0
        %721 = vmatpush1.bf16.msra.mxu0 0
        %722 = vmatprep.subr.bf16.mxu0 0
        %723 = vmatpush1.bf16.msra.mxu0 0
        %724 = vmatprep.subr.bf16.mxu0 0
        %725 = vmatpush1.bf16.msra.mxu0 0
        %726 = vmatprep.subr.bf16.mxu0 0
        %727 = vmatpush1.bf16.msra.mxu0 0
        %728 = vmatprep.subr.bf16.mxu0 0
        %729 = vmatpush1.bf16.msra.mxu0 0
        %730 = vmatprep.subr.bf16.mxu0 0
        %731 = vmatpush1.bf16.msra.mxu0 %v714
        %732 = vmatprep.subr.bf16.mxu0 0
        %733 = vmatpush2.bf16.msra.mxu0 0
        %734 = vmatprep.subr.bf16.mxu0 0
        %735 = vmatpush2.bf16.msra.mxu0 0
        %736 = vmatprep.subr.bf16.mxu0 0
        %737 = vmatpush2.bf16.msra.mxu0 0
        %738 = vmatprep.subr.bf16.mxu0 0
        %739 = vmatpush2.bf16.msra.mxu0 0
        %740 = vmatprep.subr.bf16.mxu0 0
        %741 = vmatpush2.bf16.msra.mxu0 0
        %742 = vmatprep.subr.bf16.mxu0 0
        %743 = vmatpush2.bf16.msra.mxu0 0
        %744 = vmatprep.subr.bf16.mxu0 0
        %745 = vmatpush2.bf16.msra.mxu0 0
        %746 = vmatprep.subr.bf16.mxu0 0
        %747 = vmatpush2.bf16.msra.mxu0 0
        %748 = vmatprep.mubr.bf16.mxu0 0
        %749 = vmatmul.mubr.bf16.gmra.mxu0 %v710
        %v750 = vpop.f32.mrf.mxu0
        %v751 = vadd.f32 0.0, %v750
        %v752 = vpop.f32.mrf.mxu0
        %v753 = vpop.f32.mrf.mxu0
        %v754 = vpop.f32.mrf.mxu0
        %755 = vdwg.mxu0
        %v756 = vrcp.pop %v706
        %v757 = vmul.f32 %v751, %v756
        %v758 = vld [vmem:[#allocation2] sm:$0xff]
        %v759 = vpack.c.bf16 %v757, %v757
        %v760 = vld [vmem:[%s10] sm:$0xf]
        %v762 = vsel %vm651, %v759, 0
        %v765 = vsel %vm712, %v760, 0
        %767 = vmatprep.subr.bf16.mxu0 0
        %768 = vmatpush1.bf16.msra.mxu0 0
        %769 = vmatprep.subr.bf16.mxu0 0
        %770 = vmatpush1.bf16.msra.mxu0 0
        %771 = vmatprep.subr.bf16.mxu0 0
        %772 = vmatpush1.bf16.msra.mxu0 0
        %773 = vmatprep.subr.bf16.mxu0 0
        %774 = vmatpush1.bf16.msra.mxu0 0
        %775 = vmatprep.subr.bf16.mxu0 0
        %776 = vmatpush1.bf16.msra.mxu0 0
        %777 = vmatprep.subr.bf16.mxu0 0
        %778 = vmatpush1.bf16.msra.mxu0 0
        %779 = vmatprep.subr.bf16.mxu0 0
        %780 = vmatpush1.bf16.msra.mxu0 0
        %781 = vmatprep.subr.bf16.mxu0 0
        %782 = vmatpush1.bf16.msra.mxu0 %v765
        %783 = vmatprep.subr.bf16.mxu0 0
        %784 = vmatpush2.bf16.msra.mxu0 0
        %785 = vmatprep.subr.bf16.mxu0 0
        %786 = vmatpush2.bf16.msra.mxu0 0
        %787 = vmatprep.subr.bf16.mxu0 0
        %788 = vmatpush2.bf16.msra.mxu0 0
        %789 = vmatprep.subr.bf16.mxu0 0
        %790 = vmatpush2.bf16.msra.mxu0 0
        %791 = vmatprep.subr.bf16.mxu0 0
        %792 = vmatpush2.bf16.msra.mxu0 0
        %793 = vmatprep.subr.bf16.mxu0 0
        %794 = vmatpush2.bf16.msra.mxu0 0
        %795 = vmatprep.subr.bf16.mxu0 0
        %796 = vmatpush2.bf16.msra.mxu0 0
        %797 = vmatprep.subr.bf16.mxu0 0
        %798 = vmatpush2.bf16.msra.mxu0 0
        %799 = vmatprep.mubr.bf16.mxu0 0
        %800 = vmatmul.mubr.bf16.gmra.mxu0 %v762
        %v801 = vpop.f32.mrf.mxu0
        %v802 = vadd.f32 0.0, %v801
        %v803 = vpop.f32.mrf.mxu0
        %v804 = vpop.f32.mrf.mxu0
        %v805 = vpop.f32.mrf.mxu0
        %806 = vdwg.mxu0
        %v807 = vadd.f32 %v758, %v802
        %808 = vst.msk [vmem:[#allocation2] sm:$0xff] %vm448, %v807
        %s809 = scalar_lea.vmem %s4, 16
        %v810 = vld [vmem:[%s809] sm:$0xf]
        %v811 = vld [vmem:[%s809 + $0x4] sm:$0xf]
        %v812 = vld [vmem:[%s809 + $0x8] sm:$0xf]
        %v813 = vld [vmem:[%s809 + $0xc] sm:$0xf]
        %s814 = scalar_lea.vmem %s5, 1
        %v815 = vld [vmem:[%s814] sm:$0x1]
        %v817 = vlaneseq
        %v818 = vshrl.u32 %v817, 7
        %v819 = vsub.s32 0, %v818
        %v820 = vrot.slane %v815, %v819
        %v826 = vunpack.c.l.b16 %v810
        %v827 = vunpack.c.l.b16 %v811
        %v828 = vunpack.c.l.b16 %v812
        %v829 = vunpack.c.l.b16 %v813
        %v830 = vpack.c.b16 %v827, %v826
        %v831 = vpack.c.b16 %v829, %v828
        %834 = vmatprep.subr.bf16.mxu0 0
        %835 = vmatpush1.bf16.msra.mxu0 0
        %836 = vmatprep.subr.bf16.mxu0 0
        %837 = vmatpush1.bf16.msra.mxu0 0
        %838 = vmatprep.subr.bf16.mxu0 0
        %839 = vmatpush1.bf16.msra.mxu0 0
        %840 = vmatprep.subr.bf16.mxu0 0
        %841 = vmatpush1.bf16.msra.mxu0 0
        %842 = vmatprep.subr.bf16.mxu0 0
        %843 = vmatpush1.bf16.msra.mxu0 0
        %844 = vmatprep.subr.bf16.mxu0 0
        %845 = vmatpush1.bf16.msra.mxu0 0
        %846 = vmatprep.subr.bf16.mxu0 0
        %847 = vmatpush1.bf16.msra.mxu0 %v831
        %848 = vmatprep.subr.bf16.mxu0 0
        %849 = vmatpush1.bf16.msra.mxu0 %v830
        %850 = vmatprep.subr.bf16.mxu0 0
        %851 = vmatpush2.bf16.msra.mxu0 0
        %852 = vmatprep.subr.bf16.mxu0 0
        %853 = vmatpush2.bf16.msra.mxu0 0
        %854 = vmatprep.subr.bf16.mxu0 0
        %855 = vmatpush2.bf16.msra.mxu0 0
        %856 = vmatprep.subr.bf16.mxu0 0
        %857 = vmatpush2.bf16.msra.mxu0 0
        %858 = vmatprep.subr.bf16.mxu0 0
        %859 = vmatpush2.bf16.msra.mxu0 0
        %860 = vmatprep.subr.bf16.mxu0 0
        %861 = vmatpush2.bf16.msra.mxu0 0
        %862 = vmatprep.subr.bf16.mxu0 0
        %863 = vmatpush2.bf16.msra.mxu0 0
        %864 = vmatprep.subr.bf16.mxu0 0
        %865 = vmatpush2.bf16.msra.mxu0 0
        %866 = vmatprep.mubr.bf16.mxu0 0
        %867 = vmatmul.mubr.bf16.gmra.mxu0 %v474
        %v868 = vpop.f32.mrf.mxu0
        %v869 = vadd.f32 %v820, %v868
        %v870 = vpop.f32.mrf.mxu0
        %v871 = vpop.f32.mrf.mxu0
        %v872 = vpop.f32.mrf.mxu0
        %873 = vdwg.mxu0
        %v874 = vmul.f32 %v869, 0.35355338
        %s875 = scalar_lea.vmem %s6, 16
        %v876 = vld [vmem:[%s875] sm:$0xf]
        %v877 = vld [vmem:[%s875 + $0x4] sm:$0xf]
        %v878 = vld [vmem:[%s875 + $0x8] sm:$0xf]
        %v879 = vld [vmem:[%s875 + $0xc] sm:$0xf]
        %s880 = scalar_lea.vmem %s7, 1
        %v881 = vld [vmem:[%s880] sm:$0x1]
        %v883 = vlaneseq
        %v884 = vshrl.u32 %v883, 7
        %v885 = vsub.s32 0, %v884
        %v886 = vrot.slane %v881, %v885
        %v892 = vunpack.c.l.b16 %v876
        %v893 = vunpack.c.l.b16 %v877
        %v894 = vunpack.c.l.b16 %v878
        %v895 = vunpack.c.l.b16 %v879
        %v896 = vpack.c.b16 %v893, %v892
        %v897 = vpack.c.b16 %v895, %v894
        %900 = vmatprep.subr.bf16.mxu0 0
        %901 = vmatpush1.bf16.msra.mxu0 0
        %902 = vmatprep.subr.bf16.mxu0 0
        %903 = vmatpush1.bf16.msra.mxu0 0
        %904 = vmatprep.subr.bf16.mxu0 0
        %905 = vmatpush1.bf16.msra.mxu0 0
        %906 = vmatprep.subr.bf16.mxu0 0
        %907 = vmatpush1.bf16.msra.mxu0 0
        %908 = vmatprep.subr.bf16.mxu0 0
        %909 = vmatpush1.bf16.msra.mxu0 0
        %910 = vmatprep.subr.bf16.mxu0 0
        %911 = vmatpush1.bf16.msra.mxu0 0
        %912 = vmatprep.subr.bf16.mxu0 0
        %913 = vmatpush1.bf16.msra.mxu0 %v897
        %914 = vmatprep.subr.bf16.mxu0 0
        %915 = vmatpush1.bf16.msra.mxu0 %v896
        %916 = vmatprep.subr.bf16.mxu0 0
        %917 = vmatpush2.bf16.msra.mxu0 0
        %918 = vmatprep.subr.bf16.mxu0 0
        %919 = vmatpush2.bf16.msra.mxu0 0
        %920 = vmatprep.subr.bf16.mxu0 0
        %921 = vmatpush2.bf16.msra.mxu0 0
        %922 = vmatprep.subr.bf16.mxu0 0
        %923 = vmatpush2.bf16.msra.mxu0 0
        %924 = vmatprep.subr.bf16.mxu0 0
        %925 = vmatpush2.bf16.msra.mxu0 0
        %926 = vmatprep.subr.bf16.mxu0 0
        %927 = vmatpush2.bf16.msra.mxu0 0
        %928 = vmatprep.subr.bf16.mxu0 0
        %929 = vmatpush2.bf16.msra.mxu0 0
        %930 = vmatprep.subr.bf16.mxu0 0
        %931 = vmatpush2.bf16.msra.mxu0 0
        %932 = vmatprep.mubr.bf16.mxu0 0
        %933 = vmatmul.mubr.bf16.gmra.mxu0 %v541
        %v934 = vpop.f32.mrf.mxu0
        %v935 = vadd.f32 %v886, %v934
        %v936 = vpop.f32.mrf.mxu0
        %v937 = vpop.f32.mrf.mxu0
        %v938 = vpop.f32.mrf.mxu0
        %939 = vdwg.mxu0
        %s940 = scalar_lea.vmem %s8, 16
        %v941 = vld [vmem:[%s940] sm:$0xf]
        %v942 = vld [vmem:[%s940 + $0x4] sm:$0xf]
        %v943 = vld [vmem:[%s940 + $0x8] sm:$0xf]
        %v944 = vld [vmem:[%s940 + $0xc] sm:$0xf]
        %s945 = scalar_lea.vmem %s9, 1
        %v946 = vld [vmem:[%s945] sm:$0x1]
        %v948 = vlaneseq
        %v949 = vshrl.u32 %v948, 7
        %v950 = vsub.s32 0, %v949
        %v951 = vrot.slane %v946, %v950
        %v957 = vunpack.c.l.b16 %v941
        %v958 = vunpack.c.l.b16 %v942
        %v959 = vunpack.c.l.b16 %v943
        %v960 = vunpack.c.l.b16 %v944
        %v961 = vpack.c.b16 %v958, %v957
        %v962 = vpack.c.b16 %v960, %v959
        %965 = vmatprep.subr.bf16.mxu0 0
        %966 = vmatpush1.bf16.msra.mxu0 0
        %967 = vmatprep.subr.bf16.mxu0 0
        %968 = vmatpush1.bf16.msra.mxu0 0
        %969 = vmatprep.subr.bf16.mxu0 0
        %970 = vmatpush1.bf16.msra.mxu0 0
        %971 = vmatprep.subr.bf16.mxu0 0
        %972 = vmatpush1.bf16.msra.mxu0 0
        %973 = vmatprep.subr.bf16.mxu0 0
        %974 = vmatpush1.bf16.msra.mxu0 0
        %975 = vmatprep.subr.bf16.mxu0 0
        %976 = vmatpush1.bf16.msra.mxu0 0
        %977 = vmatprep.subr.bf16.mxu0 0
        %978 = vmatpush1.bf16.msra.mxu0 %v962
        %979 = vmatprep.subr.bf16.mxu0 0
        %980 = vmatpush1.bf16.msra.mxu0 %v961
        %981 = vmatprep.subr.bf16.mxu0 0
        %982 = vmatpush2.bf16.msra.mxu0 0
        %983 = vmatprep.subr.bf16.mxu0 0
        %984 = vmatpush2.bf16.msra.mxu0 0
        %985 = vmatprep.subr.bf16.mxu0 0
        %986 = vmatpush2.bf16.msra.mxu0 0
        %987 = vmatprep.subr.bf16.mxu0 0
        %988 = vmatpush2.bf16.msra.mxu0 0
        %989 = vmatprep.subr.bf16.mxu0 0
        %990 = vmatpush2.bf16.msra.mxu0 0
        %991 = vmatprep.subr.bf16.mxu0 0
        %992 = vmatpush2.bf16.msra.mxu0 0
        %993 = vmatprep.subr.bf16.mxu0 0
        %994 = vmatpush2.bf16.msra.mxu0 0
        %995 = vmatprep.subr.bf16.mxu0 0
        %996 = vmatpush2.bf16.msra.mxu0 0
        %997 = vmatprep.mubr.bf16.mxu0 0
        %998 = vmatmul.mubr.bf16.gmra.mxu0 %v607
        %v999 = vpop.f32.mrf.mxu0
        %v1000 = vadd.f32 %v951, %v999
        %v1001 = vpop.f32.mrf.mxu0
        %v1002 = vpop.f32.mrf.mxu0
        %v1003 = vpop.f32.mrf.mxu0
        %1004 = vdwg.mxu0
        %v1005 = vpack.c.bf16 %v874, %v874
        %v1006 = vpack.c.bf16 %v935, %v935
        %v1008 = vsel %vm651, %v1005, 0
        %v1011 = vsel %vm651, %v1006, 0
        %1013 = vmatprep.subr.bf16.mxu0 0
        %1014 = vmatpush1.bf16.xpose.msra.mxu0 0
        %1015 = vmatprep.subr.bf16.mxu0 0
        %1016 = vmatpush1.bf16.xpose.msra.mxu0 0
        %1017 = vmatprep.subr.bf16.mxu0 0
        %1018 = vmatpush1.bf16.xpose.msra.mxu0 0
        %1019 = vmatprep.subr.bf16.mxu0 0
        %1020 = vmatpush1.bf16.xpose.msra.mxu0 0
        %1021 = vmatprep.subr.bf16.mxu0 0
        %1022 = vmatpush1.bf16.xpose.msra.mxu0 0
        %1023 = vmatprep.subr.bf16.mxu0 0
        %1024 = vmatpush1.bf16.xpose.msra.mxu0 0
        %1025 = vmatprep.subr.bf16.mxu0 0
        %1026 = vmatpush1.bf16.xpose.msra.mxu0 0
        %1027 = vmatprep.subr.bf16.mxu0 0
        %1028 = vmatpush1.bf16.xpose.msra.mxu0 %v1011
        %1029 = vmatprep.subr.bf16.mxu0 0
        %1030 = vmatpush2.bf16.xpose.msra.mxu0 0
        %1031 = vmatprep.subr.bf16.mxu0 0
        %1032 = vmatpush2.bf16.xpose.msra.mxu0 0
        %1033 = vmatprep.subr.bf16.mxu0 0
        %1034 = vmatpush2.bf16.xpose.msra.mxu0 0
        %1035 = vmatprep.subr.bf16.mxu0 0
        %1036 = vmatpush2.bf16.xpose.msra.mxu0 0
        %1037 = vmatprep.subr.bf16.mxu0 0
        %1038 = vmatpush2.bf16.xpose.msra.mxu0 0
        %1039 = vmatprep.subr.bf16.mxu0 0
        %1040 = vmatpush2.bf16.xpose.msra.mxu0 0
        %1041 = vmatprep.subr.bf16.mxu0 0
        %1042 = vmatpush2.bf16.xpose.msra.mxu0 0
        %1043 = vmatprep.subr.bf16.mxu0 0
        %1044 = vmatpush2.bf16.xpose.msra.mxu0 0
        %1045 = vmatprep.mubr.bf16.mxu0 0
        %1046 = vmatmul.mubr.bf16.gmra.mxu0 %v1008
        %v1047 = vpop.f32.mrf.mxu0
        %v1048 = vadd.f32 %v447, %v1047
        %v1049 = vpop.f32.mrf.mxu0
        %v1050 = vpop.f32.mrf.mxu0
        %v1051 = vpop.f32.mrf.mxu0
        %1052 = vdwg.mxu0
        %v1053 = vsel %vm651, %v1048, -inf
        %1054 = vmax.xlane.f32.xlu0 %v1053
        %v1055 = vpop.xlane.xlu0 %1054
        %v1056 = vsub.f32 %v1048, %v1055
        %v1057 = vmul.f32 %v1056, 1.442695
        %v1058 = vpow.pop %v1057
        %v1059 = vsel %vm651, %v1058, 0.0
        %1060 = vadd.xlane.f32.xlu0 %v1059
        %v1061 = vpop.xlane.xlu0 %1060
        %v1062 = vpack.c.bf16 %v1058, %v1058
        %v1063 = vpack.c.bf16 %v1000, %v1000
        %v1065 = vsel %vm651, %v1062, 0
        %v1068 = vsel %vm712, %v1063, 0
        %1070 = vmatprep.subr.bf16.mxu0 0
        %1071 = vmatpush1.bf16.msra.mxu0 0
        %1072 = vmatprep.subr.bf16.mxu0 0
        %1073 = vmatpush1.bf16.msra.mxu0 0
        %1074 = vmatprep.subr.bf16.mxu0 0
        %1075 = vmatpush1.bf16.msra.mxu0 0
        %1076 = vmatprep.subr.bf16.mxu0 0
        %1077 = vmatpush1.bf16.msra.mxu0 0
        %1078 = vmatprep.subr.bf16.mxu0 0
        %1079 = vmatpush1.bf16.msra.mxu0 0
        %1080 = vmatprep.subr.bf16.mxu0 0
        %1081 = vmatpush1.bf16.msra.mxu0 0
        %1082 = vmatprep.subr.bf16.mxu0 0
        %1083 = vmatpush1.bf16.msra.mxu0 0
        %1084 = vmatprep.subr.bf16.mxu0 0
        %1085 = vmatpush1.bf16.msra.mxu0 %v1068
        %1086 = vmatprep.subr.bf16.mxu0 0
        %1087 = vmatpush2.bf16.msra.mxu0 0
        %1088 = vmatprep.subr.bf16.mxu0 0
        %1089 = vmatpush2.bf16.msra.mxu0 0
        %1090 = vmatprep.subr.bf16.mxu0 0
        %1091 = vmatpush2.bf16.msra.mxu0 0
        %1092 = vmatprep.subr.bf16.mxu0 0
        %1093 = vmatpush2.bf16.msra.mxu0 0
        %1094 = vmatprep.subr.bf16.mxu0 0
        %1095 = vmatpush2.bf16.msra.mxu0 0
        %1096 = vmatprep.subr.bf16.mxu0 0
        %1097 = vmatpush2.bf16.msra.mxu0 0
        %1098 = vmatprep.subr.bf16.mxu0 0
        %1099 = vmatpush2.bf16.msra.mxu0 0
        %1100 = vmatprep.subr.bf16.mxu0 0
        %1101 = vmatpush2.bf16.msra.mxu0 0
        %1102 = vmatprep.mubr.bf16.mxu0 0
        %1103 = vmatmul.mubr.bf16.gmra.mxu0 %v1065
        %v1104 = vpop.f32.mrf.mxu0
        %v1105 = vadd.f32 0.0, %v1104
        %v1106 = vpop.f32.mrf.mxu0
        %v1107 = vpop.f32.mrf.mxu0
        %v1108 = vpop.f32.mrf.mxu0
        %1109 = vdwg.mxu0
        %v1110 = vrcp.pop %v1061
        %v1111 = vmul.f32 %v1105, %v1110
        %v1112 = vld [vmem:[#allocation2] sm:$0xff]
        %v1113 = vpack.c.bf16 %v1111, %v1111
        %s1114 = scalar_lea.vmem %s10, 4
        %v1115 = vld [vmem:[%s1114] sm:$0xf]
        %v1117 = vsel %vm651, %v1113, 0
        %v1120 = vsel %vm712, %v1115, 0
        %1122 = vmatprep.subr.bf16.mxu0 0
        %1123 = vmatpush1.bf16.msra.mxu0 0
        %1124 = vmatprep.subr.bf16.mxu0 0
        %1125 = vmatpush1.bf16.msra.mxu0 0
        %1126 = vmatprep.subr.bf16.mxu0 0
        %1127 = vmatpush1.bf16.msra.mxu0 0
        %1128 = vmatprep.subr.bf16.mxu0 0
        %1129 = vmatpush1.bf16.msra.mxu0 0
        %1130 = vmatprep.subr.bf16.mxu0 0
        %1131 = vmatpush1.bf16.msra.mxu0 0
        %1132 = vmatprep.subr.bf16.mxu0 0
        %1133 = vmatpush1.bf16.msra.mxu0 0
        %1134 = vmatprep.subr.bf16.mxu0 0
        %1135 = vmatpush1.bf16.msra.mxu0 0
        %1136 = vmatprep.subr.bf16.mxu0 0
        %1137 = vmatpush1.bf16.msra.mxu0 %v1120
        %1138 = vmatprep.subr.bf16.mxu0 0
        %1139 = vmatpush2.bf16.msra.mxu0 0
        %1140 = vmatprep.subr.bf16.mxu0 0
        %1141 = vmatpush2.bf16.msra.mxu0 0
        %1142 = vmatprep.subr.bf16.mxu0 0
        %1143 = vmatpush2.bf16.msra.mxu0 0
        %1144 = vmatprep.subr.bf16.mxu0 0
        %1145 = vmatpush2.bf16.msra.mxu0 0
        %1146 = vmatprep.subr.bf16.mxu0 0
        %1147 = vmatpush2.bf16.msra.mxu0 0
        %1148 = vmatprep.subr.bf16.mxu0 0
        %1149 = vmatpush2.bf16.msra.mxu0 0
        %1150 = vmatprep.subr.bf16.mxu0 0
        %1151 = vmatpush2.bf16.msra.mxu0 0
        %1152 = vmatprep.subr.bf16.mxu0 0
        %1153 = vmatpush2.bf16.msra.mxu0 0
        %1154 = vmatprep.mubr.bf16.mxu0 0
        %1155 = vmatmul.mubr.bf16.gmra.mxu0 %v1117
        %v1156 = vpop.f32.mrf.mxu0
        %v1157 = vadd.f32 0.0, %v1156
        %v1158 = vpop.f32.mrf.mxu0
        %v1159 = vpop.f32.mrf.mxu0
        %v1160 = vpop.f32.mrf.mxu0
        %1161 = vdwg.mxu0
        %v1162 = vadd.f32 %v1112, %v1157
        %1163 = vst.msk [vmem:[#allocation2] sm:$0xff] %vm448, %v1162
        %s1164 = scalar_lea.vmem %s4, 32
        %v1165 = vld [vmem:[%s1164] sm:$0xf]
        %v1166 = vld [vmem:[%s1164 + $0x4] sm:$0xf]
        %v1167 = vld [vmem:[%s1164 + $0x8] sm:$0xf]
        %v1168 = vld [vmem:[%s1164 + $0xc] sm:$0xf]
        %s1169 = scalar_lea.vmem %s5, 2
        %v1170 = vld [vmem:[%s1169] sm:$0x1]
        %v1172 = vlaneseq
        %v1173 = vshrl.u32 %v1172, 7
        %v1174 = vsub.s32 0, %v1173
        %v1175 = vrot.slane %v1170, %v1174
        %v1181 = vunpack.c.l.b16 %v1165
        %v1182 = vunpack.c.l.b16 %v1166
        %v1183 = vunpack.c.l.b16 %v1167
        %v1184 = vunpack.c.l.b16 %v1168
        %v1185 = vpack.c.b16 %v1182, %v1181
        %v1186 = vpack.c.b16 %v1184, %v1183
        %1189 = vmatprep.subr.bf16.mxu0 0
        %1190 = vmatpush1.bf16.msra.mxu0 0
        %1191 = vmatprep.subr.bf16.mxu0 0
        %1192 = vmatpush1.bf16.msra.mxu0 0
        %1193 = vmatprep.subr.bf16.mxu0 0
        %1194 = vmatpush1.bf16.msra.mxu0 0
        %1195 = vmatprep.subr.bf16.mxu0 0
        %1196 = vmatpush1.bf16.msra.mxu0 0
        %1197 = vmatprep.subr.bf16.mxu0 0
        %1198 = vmatpush1.bf16.msra.mxu0 0
        %1199 = vmatprep.subr.bf16.mxu0 0
        %1200 = vmatpush1.bf16.msra.mxu0 0
        %1201 = vmatprep.subr.bf16.mxu0 0
        %1202 = vmatpush1.bf16.msra.mxu0 %v1186
        %1203 = vmatprep.subr.bf16.mxu0 0
        %1204 = vmatpush1.bf16.msra.mxu0 %v1185
        %1205 = vmatprep.subr.bf16.mxu0 0
        %1206 = vmatpush2.bf16.msra.mxu0 0
        %1207 = vmatprep.subr.bf16.mxu0 0
        %1208 = vmatpush2.bf16.msra.mxu0 0
        %1209 = vmatprep.subr.bf16.mxu0 0
        %1210 = vmatpush2.bf16.msra.mxu0 0
        %1211 = vmatprep.subr.bf16.mxu0 0
        %1212 = vmatpush2.bf16.msra.mxu0 0
        %1213 = vmatprep.subr.bf16.mxu0 0
        %1214 = vmatpush2.bf16.msra.mxu0 0
        %1215 = vmatprep.subr.bf16.mxu0 0
        %1216 = vmatpush2.bf16.msra.mxu0 0
        %1217 = vmatprep.subr.bf16.mxu0 0
        %1218 = vmatpush2.bf16.msra.mxu0 0
        %1219 = vmatprep.subr.bf16.mxu0 0
        %1220 = vmatpush2.bf16.msra.mxu0 0
        %1221 = vmatprep.mubr.bf16.mxu0 0
        %1222 = vmatmul.mubr.bf16.gmra.mxu0 %v474
        %v1223 = vpop.f32.mrf.mxu0
        %v1224 = vadd.f32 %v1175, %v1223
        %v1225 = vpop.f32.mrf.mxu0
        %v1226 = vpop.f32.mrf.mxu0
        %v1227 = vpop.f32.mrf.mxu0
        %1228 = vdwg.mxu0
        %v1229 = vmul.f32 %v1224, 0.35355338
        %s1230 = scalar_lea.vmem %s6, 32
        %v1231 = vld [vmem:[%s1230] sm:$0xf]
        %v1232 = vld [vmem:[%s1230 + $0x4] sm:$0xf]
        %v1233 = vld [vmem:[%s1230 + $0x8] sm:$0xf]
        %v1234 = vld [vmem:[%s1230 + $0xc] sm:$0xf]
        %s1235 = scalar_lea.vmem %s7, 2
        %v1236 = vld [vmem:[%s1235] sm:$0x1]
        %v1238 = vlaneseq
        %v1239 = vshrl.u32 %v1238, 7
        %v1240 = vsub.s32 0, %v1239
        %v1241 = vrot.slane %v1236, %v1240
        %v1247 = vunpack.c.l.b16 %v1231
        %v1248 = vunpack.c.l.b16 %v1232
        %v1249 = vunpack.c.l.b16 %v1233
        %v1250 = vunpack.c.l.b16 %v1234
        %v1251 = vpack.c.b16 %v1248, %v1247
        %v1252 = vpack.c.b16 %v1250, %v1249
        %1255 = vmatprep.subr.bf16.mxu0 0
        %1256 = vmatpush1.bf16.msra.mxu0 0
        %1257 = vmatprep.subr.bf16.mxu0 0
        %1258 = vmatpush1.bf16.msra.mxu0 0
        %1259 = vmatprep.subr.bf16.mxu0 0
        %1260 = vmatpush1.bf16.msra.mxu0 0
        %1261 = vmatprep.subr.bf16.mxu0 0
        %1262 = vmatpush1.bf16.msra.mxu0 0
        %1263 = vmatprep.subr.bf16.mxu0 0
        %1264 = vmatpush1.bf16.msra.mxu0 0
        %1265 = vmatprep.subr.bf16.mxu0 0
        %1266 = vmatpush1.bf16.msra.mxu0 0
        %1267 = vmatprep.subr.bf16.mxu0 0
        %1268 = vmatpush1.bf16.msra.mxu0 %v1252
        %1269 = vmatprep.subr.bf16.mxu0 0
        %1270 = vmatpush1.bf16.msra.mxu0 %v1251
        %1271 = vmatprep.subr.bf16.mxu0 0
        %1272 = vmatpush2.bf16.msra.mxu0 0
        %1273 = vmatprep.subr.bf16.mxu0 0
        %1274 = vmatpush2.bf16.msra.mxu0 0
        %1275 = vmatprep.subr.bf16.mxu0 0
        %1276 = vmatpush2.bf16.msra.mxu0 0
        %1277 = vmatprep.subr.bf16.mxu0 0
        %1278 = vmatpush2.bf16.msra.mxu0 0
        %1279 = vmatprep.subr.bf16.mxu0 0
        %1280 = vmatpush2.bf16.msra.mxu0 0
        %1281 = vmatprep.subr.bf16.mxu0 0
        %1282 = vmatpush2.bf16.msra.mxu0 0
        %1283 = vmatprep.subr.bf16.mxu0 0
        %1284 = vmatpush2.bf16.msra.mxu0 0
        %1285 = vmatprep.subr.bf16.mxu0 0
        %1286 = vmatpush2.bf16.msra.mxu0 0
        %1287 = vmatprep.mubr.bf16.mxu0 0
        %1288 = vmatmul.mubr.bf16.gmra.mxu0 %v541
        %v1289 = vpop.f32.mrf.mxu0
        %v1290 = vadd.f32 %v1241, %v1289
        %v1291 = vpop.f32.mrf.mxu0
        %v1292 = vpop.f32.mrf.mxu0
        %v1293 = vpop.f32.mrf.mxu0
        %1294 = vdwg.mxu0
        %s1295 = scalar_lea.vmem %s8, 32
        %v1296 = vld [vmem:[%s1295] sm:$0xf]
        %v1297 = vld [vmem:[%s1295 + $0x4] sm:$0xf]
        %v1298 = vld [vmem:[%s1295 + $0x8] sm:$0xf]
        %v1299 = vld [vmem:[%s1295 + $0xc] sm:$0xf]
        %s1300 = scalar_lea.vmem %s9, 2
        %v1301 = vld [vmem:[%s1300] sm:$0x1]
        %v1303 = vlaneseq
        %v1304 = vshrl.u32 %v1303, 7
        %v1305 = vsub.s32 0, %v1304
        %v1306 = vrot.slane %v1301, %v1305
        %v1312 = vunpack.c.l.b16 %v1296
        %v1313 = vunpack.c.l.b16 %v1297
        %v1314 = vunpack.c.l.b16 %v1298
        %v1315 = vunpack.c.l.b16 %v1299
        %v1316 = vpack.c.b16 %v1313, %v1312
        %v1317 = vpack.c.b16 %v1315, %v1314
        %1320 = vmatprep.subr.bf16.mxu0 0
        %1321 = vmatpush1.bf16.msra.mxu0 0
        %1322 = vmatprep.subr.bf16.mxu0 0
        %1323 = vmatpush1.bf16.msra.mxu0 0
        %1324 = vmatprep.subr.bf16.mxu0 0
        %1325 = vmatpush1.bf16.msra.mxu0 0
        %1326 = vmatprep.subr.bf16.mxu0 0
        %1327 = vmatpush1.bf16.msra.mxu0 0
        %1328 = vmatprep.subr.bf16.mxu0 0
        %1329 = vmatpush1.bf16.msra.mxu0 0
        %1330 = vmatprep.subr.bf16.mxu0 0
        %1331 = vmatpush1.bf16.msra.mxu0 0
        %1332 = vmatprep.subr.bf16.mxu0 0
        %1333 = vmatpush1.bf16.msra.mxu0 %v1317
        %1334 = vmatprep.subr.bf16.mxu0 0
        %1335 = vmatpush1.bf16.msra.mxu0 %v1316
        %1336 = vmatprep.subr.bf16.mxu0 0
        %1337 = vmatpush2.bf16.msra.mxu0 0
        %1338 = vmatprep.subr.bf16.mxu0 0
        %1339 = vmatpush2.bf16.msra.mxu0 0
        %1340 = vmatprep.subr.bf16.mxu0 0
        %1341 = vmatpush2.bf16.msra.mxu0 0
        %1342 = vmatprep.subr.bf16.mxu0 0
        %1343 = vmatpush2.bf16.msra.mxu0 0
        %1344 = vmatprep.subr.bf16.mxu0 0
        %1345 = vmatpush2.bf16.msra.mxu0 0
        %1346 = vmatprep.subr.bf16.mxu0 0
        %1347 = vmatpush2.bf16.msra.mxu0 0
        %1348 = vmatprep.subr.bf16.mxu0 0
        %1349 = vmatpush2.bf16.msra.mxu0 0
        %1350 = vmatprep.subr.bf16.mxu0 0
        %1351 = vmatpush2.bf16.msra.mxu0 0
        %1352 = vmatprep.mubr.bf16.mxu0 0
        %1353 = vmatmul.mubr.bf16.gmra.mxu0 %v607
        %v1354 = vpop.f32.mrf.mxu0
        %v1355 = vadd.f32 %v1306, %v1354
        %v1356 = vpop.f32.mrf.mxu0
        %v1357 = vpop.f32.mrf.mxu0
        %v1358 = vpop.f32.mrf.mxu0
        %1359 = vdwg.mxu0
        %v1360 = vpack.c.bf16 %v1229, %v1229
        %v1361 = vpack.c.bf16 %v1290, %v1290
        %v1363 = vsel %vm651, %v1360, 0
        %v1366 = vsel %vm651, %v1361, 0
        %1368 = vmatprep.subr.bf16.mxu0 0
        %1369 = vmatpush1.bf16.xpose.msra.mxu0 0
        %1370 = vmatprep.subr.bf16.mxu0 0
        %1371 = vmatpush1.bf16.xpose.msra.mxu0 0
        %1372 = vmatprep.subr.bf16.mxu0 0
        %1373 = vmatpush1.bf16.xpose.msra.mxu0 0
        %1374 = vmatprep.subr.bf16.mxu0 0
        %1375 = vmatpush1.bf16.xpose.msra.mxu0 0
        %1376 = vmatprep.subr.bf16.mxu0 0
        %1377 = vmatpush1.bf16.xpose.msra.mxu0 0
        %1378 = vmatprep.subr.bf16.mxu0 0
        %1379 = vmatpush1.bf16.xpose.msra.mxu0 0
        %1380 = vmatprep.subr.bf16.mxu0 0
        %1381 = vmatpush1.bf16.xpose.msra.mxu0 0
        %1382 = vmatprep.subr.bf16.mxu0 0
        %1383 = vmatpush1.bf16.xpose.msra.mxu0 %v1366
        %1384 = vmatprep.subr.bf16.mxu0 0
        %1385 = vmatpush2.bf16.xpose.msra.mxu0 0
        %1386 = vmatprep.subr.bf16.mxu0 0
        %1387 = vmatpush2.bf16.xpose.msra.mxu0 0
        %1388 = vmatprep.subr.bf16.mxu0 0
        %1389 = vmatpush2.bf16.xpose.msra.mxu0 0
        %1390 = vmatprep.subr.bf16.mxu0 0
        %1391 = vmatpush2.bf16.xpose.msra.mxu0 0
        %1392 = vmatprep.subr.bf16.mxu0 0
        %1393 = vmatpush2.bf16.xpose.msra.mxu0 0
        %1394 = vmatprep.subr.bf16.mxu0 0
        %1395 = vmatpush2.bf16.xpose.msra.mxu0 0
        %1396 = vmatprep.subr.bf16.mxu0 0
        %1397 = vmatpush2.bf16.xpose.msra.mxu0 0
        %1398 = vmatprep.subr.bf16.mxu0 0
        %1399 = vmatpush2.bf16.xpose.msra.mxu0 0
        %1400 = vmatprep.mubr.bf16.mxu0 0
        %1401 = vmatmul.mubr.bf16.gmra.mxu0 %v1363
        %v1402 = vpop.f32.mrf.mxu0
        %v1403 = vadd.f32 %v447, %v1402
        %v1404 = vpop.f32.mrf.mxu0
        %v1405 = vpop.f32.mrf.mxu0
        %v1406 = vpop.f32.mrf.mxu0
        %1407 = vdwg.mxu0
        %v1408 = vsel %vm651, %v1403, -inf
        %1409 = vmax.xlane.f32.xlu0 %v1408
        %v1410 = vpop.xlane.xlu0 %1409
        %v1411 = vsub.f32 %v1403, %v1410
        %v1412 = vmul.f32 %v1411, 1.442695
        %v1413 = vpow.pop %v1412
        %v1414 = vsel %vm651, %v1413, 0.0
        %1415 = vadd.xlane.f32.xlu0 %v1414
        %v1416 = vpop.xlane.xlu0 %1415
        %v1417 = vpack.c.bf16 %v1413, %v1413
        %v1418 = vpack.c.bf16 %v1355, %v1355
        %v1420 = vsel %vm651, %v1417, 0
        %v1423 = vsel %vm712, %v1418, 0
        %1425 = vmatprep.subr.bf16.mxu0 0
        %1426 = vmatpush1.bf16.msra.mxu0 0
        %1427 = vmatprep.subr.bf16.mxu0 0
        %1428 = vmatpush1.bf16.msra.mxu0 0
        %1429 = vmatprep.subr.bf16.mxu0 0
        %1430 = vmatpush1.bf16.msra.mxu0 0
        %1431 = vmatprep.subr.bf16.mxu0 0
        %1432 = vmatpush1.bf16.msra.mxu0 0
        %1433 = vmatprep.subr.bf16.mxu0 0
        %1434 = vmatpush1.bf16.msra.mxu0 0
        %1435 = vmatprep.subr.bf16.mxu0 0
        %1436 = vmatpush1.bf16.msra.mxu0 0
        %1437 = vmatprep.subr.bf16.mxu0 0
        %1438 = vmatpush1.bf16.msra.mxu0 0
        %1439 = vmatprep.subr.bf16.mxu0 0
        %1440 = vmatpush1.bf16.msra.mxu0 %v1423
        %1441 = vmatprep.subr.bf16.mxu0 0
        %1442 = vmatpush2.bf16.msra.mxu0 0
        %1443 = vmatprep.subr.bf16.mxu0 0
        %1444 = vmatpush2.bf16.msra.mxu0 0
        %1445 = vmatprep.subr.bf16.mxu0 0
        %1446 = vmatpush2.bf16.msra.mxu0 0
        %1447 = vmatprep.subr.bf16.mxu0 0
        %1448 = vmatpush2.bf16.msra.mxu0 0
        %1449 = vmatprep.subr.bf16.mxu0 0
        %1450 = vmatpush2.bf16.msra.mxu0 0
        %1451 = vmatprep.subr.bf16.mxu0 0
        %1452 = vmatpush2.bf16.msra.mxu0 0
        %1453 = vmatprep.subr.bf16.mxu0 0
        %1454 = vmatpush2.bf16.msra.mxu0 0
        %1455 = vmatprep.subr.bf16.mxu0 0
        %1456 = vmatpush2.bf16.msra.mxu0 0
        %1457 = vmatprep.mubr.bf16.mxu0 0
        %1458 = vmatmul.mubr.bf16.gmra.mxu0 %v1420
        %v1459 = vpop.f32.mrf.mxu0
        %v1460 = vadd.f32 0.0, %v1459
        %v1461 = vpop.f32.mrf.mxu0
        %v1462 = vpop.f32.mrf.mxu0
        %v1463 = vpop.f32.mrf.mxu0
        %1464 = vdwg.mxu0
        %v1465 = vrcp.pop %v1416
        %v1466 = vmul.f32 %v1460, %v1465
        %v1467 = vld [vmem:[#allocation2] sm:$0xff]
        %v1468 = vpack.c.bf16 %v1466, %v1466
        %s1469 = scalar_lea.vmem %s10, 8
        %v1470 = vld [vmem:[%s1469] sm:$0xf]
        %v1472 = vsel %vm651, %v1468, 0
        %v1475 = vsel %vm712, %v1470, 0
        %1477 = vmatprep.subr.bf16.mxu0 0
        %1478 = vmatpush1.bf16.msra.mxu0 0
        %1479 = vmatprep.subr.bf16.mxu0 0
        %1480 = vmatpush1.bf16.msra.mxu0 0
        %1481 = vmatprep.subr.bf16.mxu0 0
        %1482 = vmatpush1.bf16.msra.mxu0 0
        %1483 = vmatprep.subr.bf16.mxu0 0
        %1484 = vmatpush1.bf16.msra.mxu0 0
        %1485 = vmatprep.subr.bf16.mxu0 0
        %1486 = vmatpush1.bf16.msra.mxu0 0
        %1487 = vmatprep.subr.bf16.mxu0 0
        %1488 = vmatpush1.bf16.msra.mxu0 0
        %1489 = vmatprep.subr.bf16.mxu0 0
        %1490 = vmatpush1.bf16.msra.mxu0 0
        %1491 = vmatprep.subr.bf16.mxu0 0
        %1492 = vmatpush1.bf16.msra.mxu0 %v1475
        %1493 = vmatprep.subr.bf16.mxu0 0
        %1494 = vmatpush2.bf16.msra.mxu0 0
        %1495 = vmatprep.subr.bf16.mxu0 0
        %1496 = vmatpush2.bf16.msra.mxu0 0
        %1497 = vmatprep.subr.bf16.mxu0 0
        %1498 = vmatpush2.bf16.msra.mxu0 0
        %1499 = vmatprep.subr.bf16.mxu0 0
        %1500 = vmatpush2.bf16.msra.mxu0 0
        %1501 = vmatprep.subr.bf16.mxu0 0
        %1502 = vmatpush2.bf16.msra.mxu0 0
        %1503 = vmatprep.subr.bf16.mxu0 0
        %1504 = vmatpush2.bf16.msra.mxu0 0
        %1505 = vmatprep.subr.bf16.mxu0 0
        %1506 = vmatpush2.bf16.msra.mxu0 0
        %1507 = vmatprep.subr.bf16.mxu0 0
        %1508 = vmatpush2.bf16.msra.mxu0 0
        %1509 = vmatprep.mubr.bf16.mxu0 0
        %1510 = vmatmul.mubr.bf16.gmra.mxu0 %v1472
        %v1511 = vpop.f32.mrf.mxu0
        %v1512 = vadd.f32 0.0, %v1511
        %v1513 = vpop.f32.mrf.mxu0
        %v1514 = vpop.f32.mrf.mxu0
        %v1515 = vpop.f32.mrf.mxu0
        %1516 = vdwg.mxu0
        %v1517 = vadd.f32 %v1467, %v1512
        %1518 = vst.msk [vmem:[#allocation2] sm:$0xff] %vm448, %v1517
        %s1519 = scalar_lea.vmem %s4, 48
        %v1520 = vld [vmem:[%s1519] sm:$0xf]
        %v1521 = vld [vmem:[%s1519 + $0x4] sm:$0xf]
        %v1522 = vld [vmem:[%s1519 + $0x8] sm:$0xf]
        %v1523 = vld [vmem:[%s1519 + $0xc] sm:$0xf]
        %s1524 = scalar_lea.vmem %s5, 3
        %v1525 = vld [vmem:[%s1524] sm:$0x1]
        %v1527 = vlaneseq
        %v1528 = vshrl.u32 %v1527, 7
        %v1529 = vsub.s32 0, %v1528
        %v1530 = vrot.slane %v1525, %v1529
        %v1536 = vunpack.c.l.b16 %v1520
        %v1537 = vunpack.c.l.b16 %v1521
        %v1538 = vunpack.c.l.b16 %v1522
        %v1539 = vunpack.c.l.b16 %v1523
        %v1540 = vpack.c.b16 %v1537, %v1536
        %v1541 = vpack.c.b16 %v1539, %v1538
        %1544 = vmatprep.subr.bf16.mxu0 0
        %1545 = vmatpush1.bf16.msra.mxu0 0
        %1546 = vmatprep.subr.bf16.mxu0 0
        %1547 = vmatpush1.bf16.msra.mxu0 0
        %1548 = vmatprep.subr.bf16.mxu0 0
        %1549 = vmatpush1.bf16.msra.mxu0 0
        %1550 = vmatprep.subr.bf16.mxu0 0
        %1551 = vmatpush1.bf16.msra.mxu0 0
        %1552 = vmatprep.subr.bf16.mxu0 0
        %1553 = vmatpush1.bf16.msra.mxu0 0
        %1554 = vmatprep.subr.bf16.mxu0 0
        %1555 = vmatpush1.bf16.msra.mxu0 0
        %1556 = vmatprep.subr.bf16.mxu0 0
        %1557 = vmatpush1.bf16.msra.mxu0 %v1541
        %1558 = vmatprep.subr.bf16.mxu0 0
        %1559 = vmatpush1.bf16.msra.mxu0 %v1540
        %1560 = vmatprep.subr.bf16.mxu0 0
        %1561 = vmatpush2.bf16.msra.mxu0 0
        %1562 = vmatprep.subr.bf16.mxu0 0
        %1563 = vmatpush2.bf16.msra.mxu0 0
        %1564 = vmatprep.subr.bf16.mxu0 0
        %1565 = vmatpush2.bf16.msra.mxu0 0
        %1566 = vmatprep.subr.bf16.mxu0 0
        %1567 = vmatpush2.bf16.msra.mxu0 0
        %1568 = vmatprep.subr.bf16.mxu0 0
        %1569 = vmatpush2.bf16.msra.mxu0 0
        %1570 = vmatprep.subr.bf16.mxu0 0
        %1571 = vmatpush2.bf16.msra.mxu0 0
        %1572 = vmatprep.subr.bf16.mxu0 0
        %1573 = vmatpush2.bf16.msra.mxu0 0
        %1574 = vmatprep.subr.bf16.mxu0 0
        %1575 = vmatpush2.bf16.msra.mxu0 0
        %1576 = vmatprep.mubr.bf16.mxu0 0
        %1577 = vmatmul.mubr.bf16.gmra.mxu0 %v474
        %v1578 = vpop.f32.mrf.mxu0
        %v1579 = vadd.f32 %v1530, %v1578
        %v1580 = vpop.f32.mrf.mxu0
        %v1581 = vpop.f32.mrf.mxu0
        %v1582 = vpop.f32.mrf.mxu0
        %1583 = vdwg.mxu0
        %v1584 = vmul.f32 %v1579, 0.35355338
        %s1585 = scalar_lea.vmem %s6, 48
        %v1586 = vld [vmem:[%s1585] sm:$0xf]
        %v1587 = vld [vmem:[%s1585 + $0x4] sm:$0xf]
        %v1588 = vld [vmem:[%s1585 + $0x8] sm:$0xf]
        %v1589 = vld [vmem:[%s1585 + $0xc] sm:$0xf]
        %s1590 = scalar_lea.vmem %s7, 3
        %v1591 = vld [vmem:[%s1590] sm:$0x1]
        %v1593 = vlaneseq
        %v1594 = vshrl.u32 %v1593, 7
        %v1595 = vsub.s32 0, %v1594
        %v1596 = vrot.slane %v1591, %v1595
        %v1602 = vunpack.c.l.b16 %v1586
        %v1603 = vunpack.c.l.b16 %v1587
        %v1604 = vunpack.c.l.b16 %v1588
        %v1605 = vunpack.c.l.b16 %v1589
        %v1606 = vpack.c.b16 %v1603, %v1602
        %v1607 = vpack.c.b16 %v1605, %v1604
        %1610 = vmatprep.subr.bf16.mxu0 0
        %1611 = vmatpush1.bf16.msra.mxu0 0
        %1612 = vmatprep.subr.bf16.mxu0 0
        %1613 = vmatpush1.bf16.msra.mxu0 0
        %1614 = vmatprep.subr.bf16.mxu0 0
        %1615 = vmatpush1.bf16.msra.mxu0 0
        %1616 = vmatprep.subr.bf16.mxu0 0
        %1617 = vmatpush1.bf16.msra.mxu0 0
        %1618 = vmatprep.subr.bf16.mxu0 0
        %1619 = vmatpush1.bf16.msra.mxu0 0
        %1620 = vmatprep.subr.bf16.mxu0 0
        %1621 = vmatpush1.bf16.msra.mxu0 0
        %1622 = vmatprep.subr.bf16.mxu0 0
        %1623 = vmatpush1.bf16.msra.mxu0 %v1607
        %1624 = vmatprep.subr.bf16.mxu0 0
        %1625 = vmatpush1.bf16.msra.mxu0 %v1606
        %1626 = vmatprep.subr.bf16.mxu0 0
        %1627 = vmatpush2.bf16.msra.mxu0 0
        %1628 = vmatprep.subr.bf16.mxu0 0
        %1629 = vmatpush2.bf16.msra.mxu0 0
        %1630 = vmatprep.subr.bf16.mxu0 0
        %1631 = vmatpush2.bf16.msra.mxu0 0
        %1632 = vmatprep.subr.bf16.mxu0 0
        %1633 = vmatpush2.bf16.msra.mxu0 0
        %1634 = vmatprep.subr.bf16.mxu0 0
        %1635 = vmatpush2.bf16.msra.mxu0 0
        %1636 = vmatprep.subr.bf16.mxu0 0
        %1637 = vmatpush2.bf16.msra.mxu0 0
        %1638 = vmatprep.subr.bf16.mxu0 0
        %1639 = vmatpush2.bf16.msra.mxu0 0
        %1640 = vmatprep.subr.bf16.mxu0 0
        %1641 = vmatpush2.bf16.msra.mxu0 0
        %1642 = vmatprep.mubr.bf16.mxu0 0
        %1643 = vmatmul.mubr.bf16.gmra.mxu0 %v541
        %v1644 = vpop.f32.mrf.mxu0
        %v1645 = vadd.f32 %v1596, %v1644
        %v1646 = vpop.f32.mrf.mxu0
        %v1647 = vpop.f32.mrf.mxu0
        %v1648 = vpop.f32.mrf.mxu0
        %1649 = vdwg.mxu0
        %s1650 = scalar_lea.vmem %s8, 48
        %v1651 = vld [vmem:[%s1650] sm:$0xf]
        %v1652 = vld [vmem:[%s1650 + $0x4] sm:$0xf]
        %v1653 = vld [vmem:[%s1650 + $0x8] sm:$0xf]
        %v1654 = vld [vmem:[%s1650 + $0xc] sm:$0xf]
        %s1655 = scalar_lea.vmem %s9, 3
        %v1656 = vld [vmem:[%s1655] sm:$0x1]
        %v1658 = vlaneseq
        %v1659 = vshrl.u32 %v1658, 7
        %v1660 = vsub.s32 0, %v1659
        %v1661 = vrot.slane %v1656, %v1660
        %v1667 = vunpack.c.l.b16 %v1651
        %v1668 = vunpack.c.l.b16 %v1652
        %v1669 = vunpack.c.l.b16 %v1653
        %v1670 = vunpack.c.l.b16 %v1654
        %v1671 = vpack.c.b16 %v1668, %v1667
        %v1672 = vpack.c.b16 %v1670, %v1669
        %1675 = vmatprep.subr.bf16.mxu0 0
        %1676 = vmatpush1.bf16.msra.mxu0 0
        %1677 = vmatprep.subr.bf16.mxu0 0
        %1678 = vmatpush1.bf16.msra.mxu0 0
        %1679 = vmatprep.subr.bf16.mxu0 0
        %1680 = vmatpush1.bf16.msra.mxu0 0
        %1681 = vmatprep.subr.bf16.mxu0 0
        %1682 = vmatpush1.bf16.msra.mxu0 0
        %1683 = vmatprep.subr.bf16.mxu0 0
        %1684 = vmatpush1.bf16.msra.mxu0 0
        %1685 = vmatprep.subr.bf16.mxu0 0
        %1686 = vmatpush1.bf16.msra.mxu0 0
        %1687 = vmatprep.subr.bf16.mxu0 0
        %1688 = vmatpush1.bf16.msra.mxu0 %v1672
        %1689 = vmatprep.subr.bf16.mxu0 0
        %1690 = vmatpush1.bf16.msra.mxu0 %v1671
        %1691 = vmatprep.subr.bf16.mxu0 0
        %1692 = vmatpush2.bf16.msra.mxu0 0
        %1693 = vmatprep.subr.bf16.mxu0 0
        %1694 = vmatpush2.bf16.msra.mxu0 0
        %1695 = vmatprep.subr.bf16.mxu0 0
        %1696 = vmatpush2.bf16.msra.mxu0 0
        %1697 = vmatprep.subr.bf16.mxu0 0
        %1698 = vmatpush2.bf16.msra.mxu0 0
        %1699 = vmatprep.subr.bf16.mxu0 0
        %1700 = vmatpush2.bf16.msra.mxu0 0
        %1701 = vmatprep.subr.bf16.mxu0 0
        %1702 = vmatpush2.bf16.msra.mxu0 0
        %1703 = vmatprep.subr.bf16.mxu0 0
        %1704 = vmatpush2.bf16.msra.mxu0 0
        %1705 = vmatprep.subr.bf16.mxu0 0
        %1706 = vmatpush2.bf16.msra.mxu0 0
        %1707 = vmatprep.mubr.bf16.mxu0 0
        %1708 = vmatmul.mubr.bf16.gmra.mxu0 %v607
        %v1709 = vpop.f32.mrf.mxu0
        %v1710 = vadd.f32 %v1661, %v1709
        %v1711 = vpop.f32.mrf.mxu0
        %v1712 = vpop.f32.mrf.mxu0
        %v1713 = vpop.f32.mrf.mxu0
        %1714 = vdwg.mxu0
        %v1715 = vpack.c.bf16 %v1584, %v1584
        %v1716 = vpack.c.bf16 %v1645, %v1645
        %v1718 = vsel %vm651, %v1715, 0
        %v1721 = vsel %vm651, %v1716, 0
        %1723 = vmatprep.subr.bf16.mxu0 0
        %1724 = vmatpush1.bf16.xpose.msra.mxu0 0
        %1725 = vmatprep.subr.bf16.mxu0 0
        %1726 = vmatpush1.bf16.xpose.msra.mxu0 0
        %1727 = vmatprep.subr.bf16.mxu0 0
        %1728 = vmatpush1.bf16.xpose.msra.mxu0 0
        %1729 = vmatprep.subr.bf16.mxu0 0
        %1730 = vmatpush1.bf16.xpose.msra.mxu0 0
        %1731 = vmatprep.subr.bf16.mxu0 0
        %1732 = vmatpush1.bf16.xpose.msra.mxu0 0
        %1733 = vmatprep.subr.bf16.mxu0 0
        %1734 = vmatpush1.bf16.xpose.msra.mxu0 0
        %1735 = vmatprep.subr.bf16.mxu0 0
        %1736 = vmatpush1.bf16.xpose.msra.mxu0 0
        %1737 = vmatprep.subr.bf16.mxu0 0
        %1738 = vmatpush1.bf16.xpose.msra.mxu0 %v1721
        %1739 = vmatprep.subr.bf16.mxu0 0
        %1740 = vmatpush2.bf16.xpose.msra.mxu0 0
        %1741 = vmatprep.subr.bf16.mxu0 0
        %1742 = vmatpush2.bf16.xpose.msra.mxu0 0
        %1743 = vmatprep.subr.bf16.mxu0 0
        %1744 = vmatpush2.bf16.xpose.msra.mxu0 0
        %1745 = vmatprep.subr.bf16.mxu0 0
        %1746 = vmatpush2.bf16.xpose.msra.mxu0 0
        %1747 = vmatprep.subr.bf16.mxu0 0
        %1748 = vmatpush2.bf16.xpose.msra.mxu0 0
        %1749 = vmatprep.subr.bf16.mxu0 0
        %1750 = vmatpush2.bf16.xpose.msra.mxu0 0
        %1751 = vmatprep.subr.bf16.mxu0 0
        %1752 = vmatpush2.bf16.xpose.msra.mxu0 0
        %1753 = vmatprep.subr.bf16.mxu0 0
        %1754 = vmatpush2.bf16.xpose.msra.mxu0 0
        %1755 = vmatprep.mubr.bf16.mxu0 0
        %1756 = vmatmul.mubr.bf16.gmra.mxu0 %v1718
        %v1757 = vpop.f32.mrf.mxu0
        %v1758 = vadd.f32 %v447, %v1757
        %v1759 = vpop.f32.mrf.mxu0
        %v1760 = vpop.f32.mrf.mxu0
        %v1761 = vpop.f32.mrf.mxu0
        %1762 = vdwg.mxu0
        %v1763 = vsel %vm651, %v1758, -inf
        %1764 = vmax.xlane.f32.xlu0 %v1763
        %v1765 = vpop.xlane.xlu0 %1764
        %v1766 = vsub.f32 %v1758, %v1765
        %v1767 = vmul.f32 %v1766, 1.442695
        %v1768 = vpow.pop %v1767
        %v1769 = vsel %vm651, %v1768, 0.0
        %1770 = vadd.xlane.f32.xlu0 %v1769
        %v1771 = vpop.xlane.xlu0 %1770
        %v1772 = vpack.c.bf16 %v1768, %v1768
        %v1773 = vpack.c.bf16 %v1710, %v1710
        %v1775 = vsel %vm651, %v1772, 0
        %v1778 = vsel %vm712, %v1773, 0
        %1780 = vmatprep.subr.bf16.mxu0 0
        %1781 = vmatpush1.bf16.msra.mxu0 0
        %1782 = vmatprep.subr.bf16.mxu0 0
        %1783 = vmatpush1.bf16.msra.mxu0 0
        %1784 = vmatprep.subr.bf16.mxu0 0
        %1785 = vmatpush1.bf16.msra.mxu0 0
        %1786 = vmatprep.subr.bf16.mxu0 0
        %1787 = vmatpush1.bf16.msra.mxu0 0
        %1788 = vmatprep.subr.bf16.mxu0 0
        %1789 = vmatpush1.bf16.msra.mxu0 0
        %1790 = vmatprep.subr.bf16.mxu0 0
        %1791 = vmatpush1.bf16.msra.mxu0 0
        %1792 = vmatprep.subr.bf16.mxu0 0
        %1793 = vmatpush1.bf16.msra.mxu0 0
        %1794 = vmatprep.subr.bf16.mxu0 0
        %1795 = vmatpush1.bf16.msra.mxu0 %v1778
        %1796 = vmatprep.subr.bf16.mxu0 0
        %1797 = vmatpush2.bf16.msra.mxu0 0
        %1798 = vmatprep.subr.bf16.mxu0 0
        %1799 = vmatpush2.bf16.msra.mxu0 0
        %1800 = vmatprep.subr.bf16.mxu0 0
        %1801 = vmatpush2.bf16.msra.mxu0 0
        %1802 = vmatprep.subr.bf16.mxu0 0
        %1803 = vmatpush2.bf16.msra.mxu0 0
        %1804 = vmatprep.subr.bf16.mxu0 0
        %1805 = vmatpush2.bf16.msra.mxu0 0
        %1806 = vmatprep.subr.bf16.mxu0 0
        %1807 = vmatpush2.bf16.msra.mxu0 0
        %1808 = vmatprep.subr.bf16.mxu0 0
        %1809 = vmatpush2.bf16.msra.mxu0 0
        %1810 = vmatprep.subr.bf16.mxu0 0
        %1811 = vmatpush2.bf16.msra.mxu0 0
        %1812 = vmatprep.mubr.bf16.mxu0 0
        %1813 = vmatmul.mubr.bf16.gmra.mxu0 %v1775
        %v1814 = vpop.f32.mrf.mxu0
        %v1815 = vadd.f32 0.0, %v1814
        %v1816 = vpop.f32.mrf.mxu0
        %v1817 = vpop.f32.mrf.mxu0
        %v1818 = vpop.f32.mrf.mxu0
        %1819 = vdwg.mxu0
        %v1820 = vrcp.pop %v1771
        %v1821 = vmul.f32 %v1815, %v1820
        %v1822 = vld [vmem:[#allocation2] sm:$0xff]
        %v1823 = vpack.c.bf16 %v1821, %v1821
        %s1824 = scalar_lea.vmem %s10, 12
        %v1825 = vld [vmem:[%s1824] sm:$0xf]
        %v1827 = vsel %vm651, %v1823, 0
        %v1830 = vsel %vm712, %v1825, 0
        %1832 = vmatprep.subr.bf16.mxu0 0
        %1833 = vmatpush1.bf16.msra.mxu0 0
        %1834 = vmatprep.subr.bf16.mxu0 0
        %1835 = vmatpush1.bf16.msra.mxu0 0
        %1836 = vmatprep.subr.bf16.mxu0 0
        %1837 = vmatpush1.bf16.msra.mxu0 0
        %1838 = vmatprep.subr.bf16.mxu0 0
        %1839 = vmatpush1.bf16.msra.mxu0 0
        %1840 = vmatprep.subr.bf16.mxu0 0
        %1841 = vmatpush1.bf16.msra.mxu0 0
        %1842 = vmatprep.subr.bf16.mxu0 0
        %1843 = vmatpush1.bf16.msra.mxu0 0
        %1844 = vmatprep.subr.bf16.mxu0 0
        %1845 = vmatpush1.bf16.msra.mxu0 0
        %1846 = vmatprep.subr.bf16.mxu0 0
        %1847 = vmatpush1.bf16.msra.mxu0 %v1830
        %1848 = vmatprep.subr.bf16.mxu0 0
        %1849 = vmatpush2.bf16.msra.mxu0 0
        %1850 = vmatprep.subr.bf16.mxu0 0
        %1851 = vmatpush2.bf16.msra.mxu0 0
        %1852 = vmatprep.subr.bf16.mxu0 0
        %1853 = vmatpush2.bf16.msra.mxu0 0
        %1854 = vmatprep.subr.bf16.mxu0 0
        %1855 = vmatpush2.bf16.msra.mxu0 0
        %1856 = vmatprep.subr.bf16.mxu0 0
        %1857 = vmatpush2.bf16.msra.mxu0 0
        %1858 = vmatprep.subr.bf16.mxu0 0
        %1859 = vmatpush2.bf16.msra.mxu0 0
        %1860 = vmatprep.subr.bf16.mxu0 0
        %1861 = vmatpush2.bf16.msra.mxu0 0
        %1862 = vmatprep.subr.bf16.mxu0 0
        %1863 = vmatpush2.bf16.msra.mxu0 0
        %1864 = vmatprep.mubr.bf16.mxu0 0
        %1865 = vmatmul.mubr.bf16.gmra.mxu0 %v1827
        %v1866 = vpop.f32.mrf.mxu0
        %v1867 = vadd.f32 0.0, %v1866
        %v1868 = vpop.f32.mrf.mxu0
        %v1869 = vpop.f32.mrf.mxu0
        %v1870 = vpop.f32.mrf.mxu0
        %1871 = vdwg.mxu0
        %v1872 = vadd.f32 %v1822, %v1867
        %1873 = vst.msk [vmem:[#allocation2] sm:$0xff] %vm448, %v1872
        %v1874 = vld [vmem:[#allocation2] sm:$0xff]
        %v1875 = vld [vmem:[%s11] sm:$0x1]
        %v1877 = vlaneseq
        %v1878 = vshrl.u32 %v1877, 7
        %v1879 = vsub.s32 0, %v1878
        %v1880 = vrot.slane %v1875, %v1879
        %v1882 = vadd.f32 %v1874, %v1880
        %1883 = vst.msk [vmem:[%s430] sm:$0xff] %vm448, %v1882
        %s1884 = sand.u32 %s301, 1
        %s1885 = scalar_lea.sflag [#allocation4], %s1884
        %s1886 = sand.u32 %s301, 1
        %s1887 = smul.addr %s1886, 8
        %s1888 = scalar_lea.vmem [#allocation3], %s1887
        // Predicated region
        $region69: #{tpu_custom_call.1} parent=67 // pred_check
          %p1889 = pneg %p311
        $region70: #{tpu_custom_call.1} parent=67 // pred_check_branch
          %1891 = sbr.rel (%p1889) target = $region72
        $region71: #{tpu_custom_call.1} parent=67 // pred_region
          %s1893 = ssub.s32 128, 128
          %1894 = vsyncadd %s1885, %s1893
          %s1895 = smul.addr %s26, 128
          %s1896 = scalar_lea.hbm %s12, %s1895
          %s1898 = sshll.u32 %s1888, 4
          %s1899 = int_to_ptr.vmem [resolvable:$true] %s1898
          %1901 = dma.vmem_to_hbm [thread:$0]  %s1899, 128, %s1896, %s1885
        $region72: #{tpu_custom_call.1} parent=67 // pred_fallthru
          _
      $region68: #{tpu_custom_call.1} parent=5 // pred_fallthru
        _
      %p1902 = scmp.le.s32.totalorder 2, %s21
      // Predicated region
      $region73: #{tpu_custom_call.1} parent=5 // pred_check
        %p1903 = pneg %p1902
      $region74: #{tpu_custom_call.1} parent=5 // pred_check_branch
        %1905 = sbr.rel (%p1903) target = $region76
      $region75: #{tpu_custom_call.1} parent=5 // pred_region
        %s1906 = ssub.s32 %s21, 2
        // Predicated region
        $region77: #{tpu_custom_call.1} parent=75 // pred_check
          %p1907 = pneg %p317
        $region78: #{tpu_custom_call.1} parent=75 // pred_check_branch
          %1909 = sbr.rel (%p1907) target = $region80
        $region79: #{tpu_custom_call.1} parent=75 // pred_region
          %s1910 = sand.u32 %s302, 1
          %s1911 = scalar_lea.sflag [#allocation4], %s1910
          %s1912 = sand.u32 %s302, 1
          %s1913 = smul.addr %s1912, 8
          %s1914 = scalar_lea.vmem [#allocation3], %s1913
          %1915 = dma.done %s1911, 128
        $region80: #{tpu_custom_call.1} parent=75 // pred_fallthru
          _
      $region76: #{tpu_custom_call.1} parent=5 // pred_fallthru
        _
    $region6: #{tpu_custom_call.1} parent=1 // loop_footer
      %s25 = sadd.s32 1, %s21
    $region7: #{tpu_custom_call.1} parent=1 // loop_footer_branch
      %20 = sbr.rel target = $region3
    $region8: #{tpu_custom_call.1} parent=1 // loop_exit
      _
    %1916 = vsyncpa [#allocation4], 1
    %s1917 = scalar_lea.sflag [#allocation4], 1
    %1918 = vsyncpa %s1917, 1

</llo_original>
